<compile_context>
chip_gen: v7x
topology: tpu7x:2x2x1
jax: 0.10.0
libtpu: 0.0.40
codegen_flags: <defaults>
</compile_context>

<pallas_src>
import functools

import jax
import jax.numpy as jnp
from jax.experimental import pallas as pl
from jax.experimental.pallas import tpu as pltpu

D_IN = 16          # LSTM input_size
HID = 50           # LSTM hidden_size
H_PAD = 128        # per-gate lane-aligned width
C_PAD = 128        # lane-dense classifier width (classes zero/neg-inf padded)
NUM_CLASSES = 6


def _emg_lstm_kernel(x_ref, wih_ref, whh_ref, b_ref, wd_ref, bd_ref, out_ref,
                     *, seq_len, b_block):
    """LSTM recurrence + dense + softmax for one batch block.

    x_ref   : (T*b_block, D_IN)     f32   time-major flattened batch block
    wih_ref : (D_IN, 4*H_PAD)       f32   per-gate lane-padded weight_ih.T
    whh_ref : (H_PAD, 4*H_PAD)      f32   per-gate lane-padded weight_hh.T
    b_ref   : (1, 4*H_PAD)          f32   bias_ih + bias_hh (lane-padded)
    wd_ref  : (H_PAD, C_PAD)        f32   dense.weight.T (row/col padded)
    bd_ref  : (1, C_PAD)            f32   dense bias; padded lanes = -1e30
    out_ref : (b_block, C_PAD)      f32   softmax probs (padded lanes ~ 0)
    """
    Hp = H_PAD
    x2d = x_ref[...]                    # (T*b_block, D_IN), time-major
    w_hh = whh_ref[...]                 # (Hp, 4*Hp)

    # Input projection + bias hoisted out of the recurrence: one MXU matmul,
    # off the latency-critical serial chain.
    x_proj = (jnp.dot(x2d, wih_ref[...], preferred_element_type=jnp.float32)
              + b_ref[...])             # (T*b_block, 4*Hp)

    h = jnp.zeros((b_block, Hp), jnp.float32)
    c = jnp.zeros((b_block, Hp), jnp.float32)

    # Static (unrolled) time loop; one matmul per step on the serial path.
    for t in range(seq_len):
        xp_t = x_proj[t * b_block:(t + 1) * b_block, :]       # sublane-aligned
        gates = xp_t + jnp.dot(h, w_hh, preferred_element_type=jnp.float32)
        i_g = jax.nn.sigmoid(gates[:, 0 * Hp:1 * Hp])         # 128-lane slices
        f_g = jax.nn.sigmoid(gates[:, 1 * Hp:2 * Hp])
        g_g = jnp.tanh(gates[:, 2 * Hp:3 * Hp])
        o_g = jax.nn.sigmoid(gates[:, 3 * Hp:4 * Hp])
        c = f_g * c + i_g * g_g
        h = o_g * jnp.tanh(c)
    # Padded hidden lanes stay exactly 0: zero weights/bias give gates=0 there,
    # so c_pad = 0.5*0 + 0.5*tanh(0) = 0 and h_pad = 0.5*tanh(0) = 0.

    # torch.squeeze(c1_T): final cell state is the classifier feature.
    # TODO(synk): Dropout(0.2) is identity in eval mode; training-mode RNG
    # mask is intentionally not applied here.
    logits = (jnp.dot(c, wd_ref[...], preferred_element_type=jnp.float32)
              + bd_ref[...])            # (b_block, C_PAD); pad cols = -1e30

    # softmax(dim=1); padded lanes give exp(-huge) == 0 so they don't
    # contribute to the denominator.
    m = jnp.max(logits, axis=1, keepdims=True)
    e = jnp.exp(logits - m)
    out_ref[...] = e / jnp.sum(e, axis=1, keepdims=True)


def _pack_gate_cols(w, h=HID, hp=H_PAD):
    """(rows, 4*h) -> (rows, 4*hp): each gate's columns zero-padded to hp lanes."""
    rows = w.shape[0]
    out = jnp.zeros((rows, 4 * hp), jnp.float32)
    for k in range(4):
        out = out.at[:, k * hp:k * hp + h].set(w[:, k * h:(k + 1) * h])
    return out


def _pad_rows(w, rpad):
    return jnp.pad(w.astype(jnp.float32), ((0, rpad - w.shape[0]), (0, 0)))


def emg_lstm_forward(x, params):
    """x: (B, T, 16) f32. params: dict of LSTM + dense weights (PyTorch layout)."""
    B, T, d_in = x.shape
    assert d_in == D_IN

    # ---- weight prep: per-gate 128-lane padding (zero pad => padded lanes of
    # h/c remain exactly zero through the recurrence). ----
    w_ih_p = _pack_gate_cols(params["weight_ih_l0"].T.astype(jnp.float32))      # (16, 512)
    w_hh_p = _pad_rows(
        _pack_gate_cols(params["weight_hh_l0"].T.astype(jnp.float32)), H_PAD)   # (128, 512)
    b_p = _pack_gate_cols(
        (params["bias_ih_l0"] + params["bias_hh_l0"]).reshape(1, -1)
        .astype(jnp.float32))                                                    # (1, 512)

    # ---- classifier: lane-dense output (pad classes to 128 lanes). Padded
    # logits get bias -1e30 so softmax over the real classes is unchanged. ----
    num_classes = params["dense_weight"].shape[0]
    w_d = params["dense_weight"].T.astype(jnp.float32)                           # (50, C)
    w_d_p = jnp.zeros((H_PAD, C_PAD), jnp.float32).at[:HID, :num_classes].set(w_d)
    b_d_p = (jnp.full((1, C_PAD), -1e30, jnp.float32)
             .at[0, :num_classes].set(params["dense_bias"].astype(jnp.float32)))

    # ---- batch padding / blocking: pad B to a multiple of 8 sublanes; grid
    # over batch blocks ("parallel") so big batches shard across v7x's 2 TCs. ----
    bp0 = -(-B // 8) * 8
    b_block = min(bp0, 64)               # keeps x_proj comfortably inside VMEM
    B_pad = -(-bp0 // b_block) * b_block
    n_blocks = B_pad // b_block

    x_p = jnp.pad(x.astype(jnp.float32), ((0, B_pad - B), (0, 0), (0, 0)))
    # (n_blocks, b_block, T, D) -> time-major flattened per block (done in the
    # wrapper so the kernel never reshapes).
    x3d = (x_p.reshape(n_blocks, b_block, T, D_IN)
              .transpose(0, 2, 1, 3)
              .reshape(n_blocks, T * b_block, D_IN))

    kernel = functools.partial(_emg_lstm_kernel, seq_len=T, b_block=b_block)

    def full_spec(shape):
        return pl.BlockSpec(shape, lambda i, _s=shape: (0,) * len(_s))

    out = pl.pallas_call(
        kernel,
        out_shape=jax.ShapeDtypeStruct((B_pad, C_PAD), jnp.float32),
        grid=(n_blocks,),
        in_specs=[
            pl.BlockSpec((None, T * b_block, D_IN), lambda i: (i, 0, 0)),
            full_spec(w_ih_p.shape),
            full_spec(w_hh_p.shape),
            full_spec(b_p.shape),
            full_spec(w_d_p.shape),
            full_spec(b_d_p.shape),
        ],
        out_specs=pl.BlockSpec((b_block, C_PAD), lambda i: (i, 0)),
        compiler_params=pltpu.CompilerParams(
            dimension_semantics=("parallel",)),
    )(x3d, w_ih_p, w_hh_p, b_p, w_d_p, b_d_p)
    return out[:B, :num_classes]


def _reference_forward(x, params):
    """Pure-JAX reference (mirrors PyTorch LSTM semantics)."""
    w_ih = params["weight_ih_l0"]
    w_hh = params["weight_hh_l0"]
    b = params["bias_ih_l0"] + params["bias_hh_l0"]
    B, T, _ = x.shape
    h = jnp.zeros((B, HID), jnp.float32)
    c = jnp.zeros((B, HID), jnp.float32)
    for t in range(T):
        gates = x[:, t, :] @ w_ih.T + h @ w_hh.T + b
        i_g = jax.nn.sigmoid(gates[:, 0 * HID:1 * HID])
        f_g = jax.nn.sigmoid(gates[:, 1 * HID:2 * HID])
        g_g = jnp.tanh(gates[:, 2 * HID:3 * HID])
        o_g = jax.nn.sigmoid(gates[:, 3 * HID:4 * HID])
        c = f_g * c + i_g * g_g
        h = o_g * jnp.tanh(c)
    logits = c @ params["dense_weight"].T + params["dense_bias"]
    return jax.nn.softmax(logits, axis=1)


def init_params(key, num_classes=NUM_CLASSES):
    """Deterministic synthetic weights with PyTorch-style shapes."""
    ks = jax.random.split(key, 6)
    scale = 1.0 / jnp.sqrt(HID)
    return {
        # PyTorch gate order: i, f, g, o
        "weight_ih_l0": jax.random.uniform(ks[0], (4 * HID, D_IN), jnp.float32,
                                           -scale, scale),
        "weight_hh_l0": jax.random.uniform(ks[1], (4 * HID, HID), jnp.float32,
                                           -scale, scale),
        "bias_ih_l0": jax.random.uniform(ks[2], (4 * HID,), jnp.float32,
                                         -scale, scale),
        "bias_hh_l0": jax.random.uniform(ks[3], (4 * HID,), jnp.float32,
                                         -scale, scale),
        "dense_weight": jax.random.uniform(ks[4], (num_classes, HID), jnp.float32,
                                           -scale, scale),
        "dense_bias": jax.random.uniform(ks[5], (num_classes,), jnp.float32,
                                         -scale, scale),
    }


if __name__ == "__main__":
    key = jax.random.PRNGKey(0)
    k_x, k_p = jax.random.split(key)

    B, T = 2, 8
    x = jax.random.normal(k_x, (B, T, D_IN), jnp.float32)
    params = init_params(k_p, NUM_CLASSES)

    out = emg_lstm_forward(x, params)
    out = jax.block_until_ready(out)

    ref = _reference_forward(x, params)
    assert out.shape == (B, NUM_CLASSES)
    assert jnp.allclose(out, ref, rtol=1e-4, atol=1e-4), (
        f"mismatch: max abs err {jnp.max(jnp.abs(out - ref))}")
    assert jnp.allclose(jnp.sum(out, axis=1), 1.0, atol=1e-4)

    print("KERNEL_OK")
</pallas_src>

<mosaic_0001>
module attributes {stable_mosaic.version = 11 : i64} {
  func.func @_emg_lstm_kernel(%arg0: i32, %arg1: memref<1x64x16xf32, #tpu.memory_space<vmem>>, %arg2: memref<16x512xf32, #tpu.memory_space<vmem>>, %arg3: memref<128x512xf32, #tpu.memory_space<vmem>>, %arg4: memref<1x512xf32, #tpu.memory_space<vmem>>, %arg5: memref<128x128xf32, #tpu.memory_space<vmem>>, %arg6: memref<1x128xf32, #tpu.memory_space<vmem>>, %arg7: memref<8x128xf32, #tpu.memory_space<vmem>>) attributes {dimension_semantics = [#tpu.dimension_semantics<parallel>], iteration_bounds = array<i64: 1>, scalar_prefetch = 0 : i64, scratch_operands = 0 : i64, tpu.core_type = #tpu.core_type<tc>, window_params = [{transform_indices = @transform_0, window_bounds = array<i64: 1, 64, 16>}, {pipeline_mode = #tpu.pipeline_mode<synchronous>, transform_indices = @transform_1, window_bounds = array<i64: 16, 512>}, {pipeline_mode = #tpu.pipeline_mode<synchronous>, transform_indices = @transform_2, window_bounds = array<i64: 128, 512>}, {pipeline_mode = #tpu.pipeline_mode<synchronous>, transform_indices = @transform_3, window_bounds = array<i64: 1, 512>}, {pipeline_mode = #tpu.pipeline_mode<synchronous>, transform_indices = @transform_4, window_bounds = array<i64: 128, 128>}, {pipeline_mode = #tpu.pipeline_mode<synchronous>, transform_indices = @transform_5, window_bounds = array<i64: 1, 128>}, {transform_indices = @transform_6, window_bounds = array<i64: 8, 128>}]} {
    %c0 = arith.constant 0 : index
    %c0_0 = arith.constant 0 : index
    %c0_1 = arith.constant 0 : index
    %0 = vector.load %arg1[%c0, %c0_0, %c0_1] : memref<1x64x16xf32, #tpu.memory_space<vmem>>, vector<1x64x16xf32>
    %1 = vector.shape_cast %0 : vector<1x64x16xf32> to vector<64x16xf32>
    %c0_2 = arith.constant 0 : index
    %c0_3 = arith.constant 0 : index
    %2 = vector.load %arg3[%c0_2, %c0_3] : memref<128x512xf32, #tpu.memory_space<vmem>>, vector<128x512xf32>
    %c0_4 = arith.constant 0 : index
    %c0_5 = arith.constant 0 : index
    %3 = vector.load %arg2[%c0_4, %c0_5] : memref<16x512xf32, #tpu.memory_space<vmem>>, vector<16x512xf32>
    %cst = arith.constant dense<0.000000e+00> : vector<64x512xf32>
    %4 = tpu.matmul %1, %3, %cst {dimension_numbers = #tpu.dot_dimension_numbers<[1], [0], [0], [1], [0, 0, 1, 1], [], []>} : vector<64x16xf32>, vector<16x512xf32>, vector<64x512xf32> -> vector<64x512xf32>
    %c0_6 = arith.constant 0 : index
    %c0_7 = arith.constant 0 : index
    %5 = vector.load %arg4[%c0_6, %c0_7] : memref<1x512xf32, #tpu.memory_space<vmem>>, vector<1x512xf32>
    %6 = vector.broadcast %5 : vector<1x512xf32> to vector<64x512xf32>
    %7 = arith.addf %4, %6 : vector<64x512xf32>
    %cst_8 = arith.constant 0.000000e+00 : f32
    %8 = vector.broadcast %cst_8 : f32 to vector<8x128xf32>
    %cst_9 = arith.constant 0.000000e+00 : f32
    %9 = vector.broadcast %cst_9 : f32 to vector<8x128xf32>
    %10 = vector.extract_strided_slice %7 {offsets = [0, 0], sizes = [8, 512], strides = [1, 1]} : vector<64x512xf32> to vector<8x512xf32>
    %cst_10 = arith.constant dense<0.000000e+00> : vector<8x512xf32>
    %11 = tpu.matmul %8, %2, %cst_10 {dimension_numbers = #tpu.dot_dimension_numbers<[1], [0], [0], [1], [0, 0, 1, 1], [], []>} : vector<8x128xf32>, vector<128x512xf32>, vector<8x512xf32> -> vector<8x512xf32>
    %12 = arith.addf %10, %11 : vector<8x512xf32>
    %13 = vector.extract_strided_slice %12 {offsets = [0, 0], sizes = [8, 128], strides = [1, 1]} : vector<8x512xf32> to vector<8x128xf32>
    %14 = arith.negf %13 : vector<8x128xf32>
    %15 = math.exp %14 : vector<8x128xf32>
    %cst_11 = arith.constant 1.000000e+00 : f32
    %16 = vector.broadcast %cst_11 : f32 to vector<8x128xf32>
    %17 = arith.addf %16, %15 : vector<8x128xf32>
    %18 = arith.divf %16, %17 : vector<8x128xf32>
    %19 = vector.extract_strided_slice %12 {offsets = [0, 128], sizes = [8, 128], strides = [1, 1]} : vector<8x512xf32> to vector<8x128xf32>
    %20 = arith.negf %19 : vector<8x128xf32>
    %21 = math.exp %20 : vector<8x128xf32>
    %cst_12 = arith.constant 1.000000e+00 : f32
    %22 = vector.broadcast %cst_12 : f32 to vector<8x128xf32>
    %23 = arith.addf %22, %21 : vector<8x128xf32>
    %24 = arith.divf %22, %23 : vector<8x128xf32>
    %25 = vector.extract_strided_slice %12 {offsets = [0, 256], sizes = [8, 128], strides = [1, 1]} : vector<8x512xf32> to vector<8x128xf32>
    %26 = math.tanh %25 : vector<8x128xf32>
    %27 = vector.extract_strided_slice %12 {offsets = [0, 384], sizes = [8, 128], strides = [1, 1]} : vector<8x512xf32> to vector<8x128xf32>
    %28 = arith.negf %27 : vector<8x128xf32>
    %29 = math.exp %28 : vector<8x128xf32>
    %cst_13 = arith.constant 1.000000e+00 : f32
    %30 = vector.broadcast %cst_13 : f32 to vector<8x128xf32>
    %31 = arith.addf %30, %29 : vector<8x128xf32>
    %32 = arith.divf %30, %31 : vector<8x128xf32>
    %33 = arith.mulf %24, %9 : vector<8x128xf32>
    %34 = arith.mulf %18, %26 : vector<8x128xf32>
    %35 = arith.addf %33, %34 : vector<8x128xf32>
    %36 = math.tanh %35 : vector<8x128xf32>
    %37 = arith.mulf %32, %36 : vector<8x128xf32>
    %38 = vector.extract_strided_slice %7 {offsets = [8, 0], sizes = [8, 512], strides = [1, 1]} : vector<64x512xf32> to vector<8x512xf32>
    %cst_14 = arith.constant dense<0.000000e+00> : vector<8x512xf32>
    %39 = tpu.matmul %37, %2, %cst_14 {dimension_numbers = #tpu.dot_dimension_numbers<[1], [0], [0], [1], [0, 0, 1, 1], [], []>} : vector<8x128xf32>, vector<128x512xf32>, vector<8x512xf32> -> vector<8x512xf32>
    %40 = arith.addf %38, %39 : vector<8x512xf32>
    %41 = vector.extract_strided_slice %40 {offsets = [0, 0], sizes = [8, 128], strides = [1, 1]} : vector<8x512xf32> to vector<8x128xf32>
    %42 = arith.negf %41 : vector<8x128xf32>
    %43 = math.exp %42 : vector<8x128xf32>
    %cst_15 = arith.constant 1.000000e+00 : f32
    %44 = vector.broadcast %cst_15 : f32 to vector<8x128xf32>
    %45 = arith.addf %44, %43 : vector<8x128xf32>
    %46 = arith.divf %44, %45 : vector<8x128xf32>
    %47 = vector.extract_strided_slice %40 {offsets = [0, 128], sizes = [8, 128], strides = [1, 1]} : vector<8x512xf32> to vector<8x128xf32>
    %48 = arith.negf %47 : vector<8x128xf32>
    %49 = math.exp %48 : vector<8x128xf32>
    %cst_16 = arith.constant 1.000000e+00 : f32
    %50 = vector.broadcast %cst_16 : f32 to vector<8x128xf32>
    %51 = arith.addf %50, %49 : vector<8x128xf32>
    %52 = arith.divf %50, %51 : vector<8x128xf32>
    %53 = vector.extract_strided_slice %40 {offsets = [0, 256], sizes = [8, 128], strides = [1, 1]} : vector<8x512xf32> to vector<8x128xf32>
    %54 = math.tanh %53 : vector<8x128xf32>
    %55 = vector.extract_strided_slice %40 {offsets = [0, 384], sizes = [8, 128], strides = [1, 1]} : vector<8x512xf32> to vector<8x128xf32>
    %56 = arith.negf %55 : vector<8x128xf32>
    %57 = math.exp %56 : vector<8x128xf32>
    %cst_17 = arith.constant 1.000000e+00 : f32
    %58 = vector.broadcast %cst_17 : f32 to vector<8x128xf32>
    %59 = arith.addf %58, %57 : vector<8x128xf32>
    %60 = arith.divf %58, %59 : vector<8x128xf32>
    %61 = arith.mulf %52, %35 : vector<8x128xf32>
    %62 = arith.mulf %46, %54 : vector<8x128xf32>
    %63 = arith.addf %61, %62 : vector<8x128xf32>
    %64 = math.tanh %63 : vector<8x128xf32>
    %65 = arith.mulf %60, %64 : vector<8x128xf32>
    %66 = vector.extract_strided_slice %7 {offsets = [16, 0], sizes = [8, 512], strides = [1, 1]} : vector<64x512xf32> to vector<8x512xf32>
    %cst_18 = arith.constant dense<0.000000e+00> : vector<8x512xf32>
    %67 = tpu.matmul %65, %2, %cst_18 {dimension_numbers = #tpu.dot_dimension_numbers<[1], [0], [0], [1], [0, 0, 1, 1], [], []>} : vector<8x128xf32>, vector<128x512xf32>, vector<8x512xf32> -> vector<8x512xf32>
    %68 = arith.addf %66, %67 : vector<8x512xf32>
    %69 = vector.extract_strided_slice %68 {offsets = [0, 0], sizes = [8, 128], strides = [1, 1]} : vector<8x512xf32> to vector<8x128xf32>
    %70 = arith.negf %69 : vector<8x128xf32>
    %71 = math.exp %70 : vector<8x128xf32>
    %cst_19 = arith.constant 1.000000e+00 : f32
    %72 = vector.broadcast %cst_19 : f32 to vector<8x128xf32>
    %73 = arith.addf %72, %71 : vector<8x128xf32>
    %74 = arith.divf %72, %73 : vector<8x128xf32>
    %75 = vector.extract_strided_slice %68 {offsets = [0, 128], sizes = [8, 128], strides = [1, 1]} : vector<8x512xf32> to vector<8x128xf32>
    %76 = arith.negf %75 : vector<8x128xf32>
    %77 = math.exp %76 : vector<8x128xf32>
    %cst_20 = arith.constant 1.000000e+00 : f32
    %78 = vector.broadcast %cst_20 : f32 to vector<8x128xf32>
    %79 = arith.addf %78, %77 : vector<8x128xf32>
    %80 = arith.divf %78, %79 : vector<8x128xf32>
    %81 = vector.extract_strided_slice %68 {offsets = [0, 256], sizes = [8, 128], strides = [1, 1]} : vector<8x512xf32> to vector<8x128xf32>
    %82 = math.tanh %81 : vector<8x128xf32>
    %83 = vector.extract_strided_slice %68 {offsets = [0, 384], sizes = [8, 128], strides = [1, 1]} : vector<8x512xf32> to vector<8x128xf32>
    %84 = arith.negf %83 : vector<8x128xf32>
    %85 = math.exp %84 : vector<8x128xf32>
    %cst_21 = arith.constant 1.000000e+00 : f32
    %86 = vector.broadcast %cst_21 : f32 to vector<8x128xf32>
    %87 = arith.addf %86, %85 : vector<8x128xf32>
    %88 = arith.divf %86, %87 : vector<8x128xf32>
    %89 = arith.mulf %80, %63 : vector<8x128xf32>
    %90 = arith.mulf %74, %82 : vector<8x128xf32>
    %91 = arith.addf %89, %90 : vector<8x128xf32>
    %92 = math.tanh %91 : vector<8x128xf32>
    %93 = arith.mulf %88, %92 : vector<8x128xf32>
    %94 = vector.extract_strided_slice %7 {offsets = [24, 0], sizes = [8, 512], strides = [1, 1]} : vector<64x512xf32> to vector<8x512xf32>
    %cst_22 = arith.constant dense<0.000000e+00> : vector<8x512xf32>
    %95 = tpu.matmul %93, %2, %cst_22 {dimension_numbers = #tpu.dot_dimension_numbers<[1], [0], [0], [1], [0, 0, 1, 1], [], []>} : vector<8x128xf32>, vector<128x512xf32>, vector<8x512xf32> -> vector<8x512xf32>
    %96 = arith.addf %94, %95 : vector<8x512xf32>
    %97 = vector.extract_strided_slice %96 {offsets = [0, 0], sizes = [8, 128], strides = [1, 1]} : vector<8x512xf32> to vector<8x128xf32>
    %98 = arith.negf %97 : vector<8x128xf32>
    %99 = math.exp %98 : vector<8x128xf32>
    %cst_23 = arith.constant 1.000000e+00 : f32
    %100 = vector.broadcast %cst_23 : f32 to vector<8x128xf32>
    %101 = arith.addf %100, %99 : vector<8x128xf32>
    %102 = arith.divf %100, %101 : vector<8x128xf32>
    %103 = vector.extract_strided_slice %96 {offsets = [0, 128], sizes = [8, 128], strides = [1, 1]} : vector<8x512xf32> to vector<8x128xf32>
    %104 = arith.negf %103 : vector<8x128xf32>
    %105 = math.exp %104 : vector<8x128xf32>
    %cst_24 = arith.constant 1.000000e+00 : f32
    %106 = vector.broadcast %cst_24 : f32 to vector<8x128xf32>
    %107 = arith.addf %106, %105 : vector<8x128xf32>
    %108 = arith.divf %106, %107 : vector<8x128xf32>
    %109 = vector.extract_strided_slice %96 {offsets = [0, 256], sizes = [8, 128], strides = [1, 1]} : vector<8x512xf32> to vector<8x128xf32>
    %110 = math.tanh %109 : vector<8x128xf32>
    %111 = vector.extract_strided_slice %96 {offsets = [0, 384], sizes = [8, 128], strides = [1, 1]} : vector<8x512xf32> to vector<8x128xf32>
    %112 = arith.negf %111 : vector<8x128xf32>
    %113 = math.exp %112 : vector<8x128xf32>
    %cst_25 = arith.constant 1.000000e+00 : f32
    %114 = vector.broadcast %cst_25 : f32 to vector<8x128xf32>
    %115 = arith.addf %114, %113 : vector<8x128xf32>
    %116 = arith.divf %114, %115 : vector<8x128xf32>
    %117 = arith.mulf %108, %91 : vector<8x128xf32>
    %118 = arith.mulf %102, %110 : vector<8x128xf32>
    %119 = arith.addf %117, %118 : vector<8x128xf32>
    %120 = math.tanh %119 : vector<8x128xf32>
    %121 = arith.mulf %116, %120 : vector<8x128xf32>
    %122 = vector.extract_strided_slice %7 {offsets = [32, 0], sizes = [8, 512], strides = [1, 1]} : vector<64x512xf32> to vector<8x512xf32>
    %cst_26 = arith.constant dense<0.000000e+00> : vector<8x512xf32>
    %123 = tpu.matmul %121, %2, %cst_26 {dimension_numbers = #tpu.dot_dimension_numbers<[1], [0], [0], [1], [0, 0, 1, 1], [], []>} : vector<8x128xf32>, vector<128x512xf32>, vector<8x512xf32> -> vector<8x512xf32>
    %124 = arith.addf %122, %123 : vector<8x512xf32>
    %125 = vector.extract_strided_slice %124 {offsets = [0, 0], sizes = [8, 128], strides = [1, 1]} : vector<8x512xf32> to vector<8x128xf32>
    %126 = arith.negf %125 : vector<8x128xf32>
    %127 = math.exp %126 : vector<8x128xf32>
    %cst_27 = arith.constant 1.000000e+00 : f32
    %128 = vector.broadcast %cst_27 : f32 to vector<8x128xf32>
    %129 = arith.addf %128, %127 : vector<8x128xf32>
    %130 = arith.divf %128, %129 : vector<8x128xf32>
    %131 = vector.extract_strided_slice %124 {offsets = [0, 128], sizes = [8, 128], strides = [1, 1]} : vector<8x512xf32> to vector<8x128xf32>
    %132 = arith.negf %131 : vector<8x128xf32>
    %133 = math.exp %132 : vector<8x128xf32>
    %cst_28 = arith.constant 1.000000e+00 : f32
    %134 = vector.broadcast %cst_28 : f32 to vector<8x128xf32>
    %135 = arith.addf %134, %133 : vector<8x128xf32>
    %136 = arith.divf %134, %135 : vector<8x128xf32>
    %137 = vector.extract_strided_slice %124 {offsets = [0, 256], sizes = [8, 128], strides = [1, 1]} : vector<8x512xf32> to vector<8x128xf32>
    %138 = math.tanh %137 : vector<8x128xf32>
    %139 = vector.extract_strided_slice %124 {offsets = [0, 384], sizes = [8, 128], strides = [1, 1]} : vector<8x512xf32> to vector<8x128xf32>
    %140 = arith.negf %139 : vector<8x128xf32>
    %141 = math.exp %140 : vector<8x128xf32>
    %cst_29 = arith.constant 1.000000e+00 : f32
    %142 = vector.broadcast %cst_29 : f32 to vector<8x128xf32>
    %143 = arith.addf %142, %141 : vector<8x128xf32>
    %144 = arith.divf %142, %143 : vector<8x128xf32>
    %145 = arith.mulf %136, %119 : vector<8x128xf32>
    %146 = arith.mulf %130, %138 : vector<8x128xf32>
    %147 = arith.addf %145, %146 : vector<8x128xf32>
    %148 = math.tanh %147 : vector<8x128xf32>
    %149 = arith.mulf %144, %148 : vector<8x128xf32>
    %150 = vector.extract_strided_slice %7 {offsets = [40, 0], sizes = [8, 512], strides = [1, 1]} : vector<64x512xf32> to vector<8x512xf32>
    %cst_30 = arith.constant dense<0.000000e+00> : vector<8x512xf32>
    %151 = tpu.matmul %149, %2, %cst_30 {dimension_numbers = #tpu.dot_dimension_numbers<[1], [0], [0], [1], [0, 0, 1, 1], [], []>} : vector<8x128xf32>, vector<128x512xf32>, vector<8x512xf32> -> vector<8x512xf32>
    %152 = arith.addf %150, %151 : vector<8x512xf32>
    %153 = vector.extract_strided_slice %152 {offsets = [0, 0], sizes = [8, 128], strides = [1, 1]} : vector<8x512xf32> to vector<8x128xf32>
    %154 = arith.negf %153 : vector<8x128xf32>
    %155 = math.exp %154 : vector<8x128xf32>
    %cst_31 = arith.constant 1.000000e+00 : f32
    %156 = vector.broadcast %cst_31 : f32 to vector<8x128xf32>
    %157 = arith.addf %156, %155 : vector<8x128xf32>
    %158 = arith.divf %156, %157 : vector<8x128xf32>
    %159 = vector.extract_strided_slice %152 {offsets = [0, 128], sizes = [8, 128], strides = [1, 1]} : vector<8x512xf32> to vector<8x128xf32>
    %160 = arith.negf %159 : vector<8x128xf32>
    %161 = math.exp %160 : vector<8x128xf32>
    %cst_32 = arith.constant 1.000000e+00 : f32
    %162 = vector.broadcast %cst_32 : f32 to vector<8x128xf32>
    %163 = arith.addf %162, %161 : vector<8x128xf32>
    %164 = arith.divf %162, %163 : vector<8x128xf32>
    %165 = vector.extract_strided_slice %152 {offsets = [0, 256], sizes = [8, 128], strides = [1, 1]} : vector<8x512xf32> to vector<8x128xf32>
    %166 = math.tanh %165 : vector<8x128xf32>
    %167 = vector.extract_strided_slice %152 {offsets = [0, 384], sizes = [8, 128], strides = [1, 1]} : vector<8x512xf32> to vector<8x128xf32>
    %168 = arith.negf %167 : vector<8x128xf32>
    %169 = math.exp %168 : vector<8x128xf32>
    %cst_33 = arith.constant 1.000000e+00 : f32
    %170 = vector.broadcast %cst_33 : f32 to vector<8x128xf32>
    %171 = arith.addf %170, %169 : vector<8x128xf32>
    %172 = arith.divf %170, %171 : vector<8x128xf32>
    %173 = arith.mulf %164, %147 : vector<8x128xf32>
    %174 = arith.mulf %158, %166 : vector<8x128xf32>
    %175 = arith.addf %173, %174 : vector<8x128xf32>
    %176 = math.tanh %175 : vector<8x128xf32>
    %177 = arith.mulf %172, %176 : vector<8x128xf32>
    %178 = vector.extract_strided_slice %7 {offsets = [48, 0], sizes = [8, 512], strides = [1, 1]} : vector<64x512xf32> to vector<8x512xf32>
    %cst_34 = arith.constant dense<0.000000e+00> : vector<8x512xf32>
    %179 = tpu.matmul %177, %2, %cst_34 {dimension_numbers = #tpu.dot_dimension_numbers<[1], [0], [0], [1], [0, 0, 1, 1], [], []>} : vector<8x128xf32>, vector<128x512xf32>, vector<8x512xf32> -> vector<8x512xf32>
    %180 = arith.addf %178, %179 : vector<8x512xf32>
    %181 = vector.extract_strided_slice %180 {offsets = [0, 0], sizes = [8, 128], strides = [1, 1]} : vector<8x512xf32> to vector<8x128xf32>
    %182 = arith.negf %181 : vector<8x128xf32>
    %183 = math.exp %182 : vector<8x128xf32>
    %cst_35 = arith.constant 1.000000e+00 : f32
    %184 = vector.broadcast %cst_35 : f32 to vector<8x128xf32>
    %185 = arith.addf %184, %183 : vector<8x128xf32>
    %186 = arith.divf %184, %185 : vector<8x128xf32>
    %187 = vector.extract_strided_slice %180 {offsets = [0, 128], sizes = [8, 128], strides = [1, 1]} : vector<8x512xf32> to vector<8x128xf32>
    %188 = arith.negf %187 : vector<8x128xf32>
    %189 = math.exp %188 : vector<8x128xf32>
    %cst_36 = arith.constant 1.000000e+00 : f32
    %190 = vector.broadcast %cst_36 : f32 to vector<8x128xf32>
    %191 = arith.addf %190, %189 : vector<8x128xf32>
    %192 = arith.divf %190, %191 : vector<8x128xf32>
    %193 = vector.extract_strided_slice %180 {offsets = [0, 256], sizes = [8, 128], strides = [1, 1]} : vector<8x512xf32> to vector<8x128xf32>
    %194 = math.tanh %193 : vector<8x128xf32>
    %195 = vector.extract_strided_slice %180 {offsets = [0, 384], sizes = [8, 128], strides = [1, 1]} : vector<8x512xf32> to vector<8x128xf32>
    %196 = arith.negf %195 : vector<8x128xf32>
    %197 = math.exp %196 : vector<8x128xf32>
    %cst_37 = arith.constant 1.000000e+00 : f32
    %198 = vector.broadcast %cst_37 : f32 to vector<8x128xf32>
    %199 = arith.addf %198, %197 : vector<8x128xf32>
    %200 = arith.divf %198, %199 : vector<8x128xf32>
    %201 = arith.mulf %192, %175 : vector<8x128xf32>
    %202 = arith.mulf %186, %194 : vector<8x128xf32>
    %203 = arith.addf %201, %202 : vector<8x128xf32>
    %204 = math.tanh %203 : vector<8x128xf32>
    %205 = arith.mulf %200, %204 : vector<8x128xf32>
    %206 = vector.extract_strided_slice %7 {offsets = [56, 0], sizes = [8, 512], strides = [1, 1]} : vector<64x512xf32> to vector<8x512xf32>
    %cst_38 = arith.constant dense<0.000000e+00> : vector<8x512xf32>
    %207 = tpu.matmul %205, %2, %cst_38 {dimension_numbers = #tpu.dot_dimension_numbers<[1], [0], [0], [1], [0, 0, 1, 1], [], []>} : vector<8x128xf32>, vector<128x512xf32>, vector<8x512xf32> -> vector<8x512xf32>
    %208 = arith.addf %206, %207 : vector<8x512xf32>
    %209 = vector.extract_strided_slice %208 {offsets = [0, 0], sizes = [8, 128], strides = [1, 1]} : vector<8x512xf32> to vector<8x128xf32>
    %210 = arith.negf %209 : vector<8x128xf32>
    %211 = math.exp %210 : vector<8x128xf32>
    %cst_39 = arith.constant 1.000000e+00 : f32
    %212 = vector.broadcast %cst_39 : f32 to vector<8x128xf32>
    %213 = arith.addf %212, %211 : vector<8x128xf32>
    %214 = arith.divf %212, %213 : vector<8x128xf32>
    %215 = vector.extract_strided_slice %208 {offsets = [0, 128], sizes = [8, 128], strides = [1, 1]} : vector<8x512xf32> to vector<8x128xf32>
    %216 = arith.negf %215 : vector<8x128xf32>
    %217 = math.exp %216 : vector<8x128xf32>
    %cst_40 = arith.constant 1.000000e+00 : f32
    %218 = vector.broadcast %cst_40 : f32 to vector<8x128xf32>
    %219 = arith.addf %218, %217 : vector<8x128xf32>
    %220 = arith.divf %218, %219 : vector<8x128xf32>
    %221 = vector.extract_strided_slice %208 {offsets = [0, 256], sizes = [8, 128], strides = [1, 1]} : vector<8x512xf32> to vector<8x128xf32>
    %222 = math.tanh %221 : vector<8x128xf32>
    %223 = arith.mulf %220, %203 : vector<8x128xf32>
    %224 = arith.mulf %214, %222 : vector<8x128xf32>
    %225 = arith.addf %223, %224 : vector<8x128xf32>
    %c0_41 = arith.constant 0 : index
    %c0_42 = arith.constant 0 : index
    %226 = vector.load %arg5[%c0_41, %c0_42] : memref<128x128xf32, #tpu.memory_space<vmem>>, vector<128x128xf32>
    %cst_43 = arith.constant dense<0.000000e+00> : vector<8x128xf32>
    %227 = tpu.matmul %225, %226, %cst_43 {dimension_numbers = #tpu.dot_dimension_numbers<[1], [0], [0], [1], [0, 0, 1, 1], [], []>} : vector<8x128xf32>, vector<128x128xf32>, vector<8x128xf32> -> vector<8x128xf32>
    %c0_44 = arith.constant 0 : index
    %c0_45 = arith.constant 0 : index
    %228 = vector.load %arg6[%c0_44, %c0_45] : memref<1x128xf32, #tpu.memory_space<vmem>>, vector<1x128xf32>
    %229 = vector.broadcast %228 : vector<1x128xf32> to vector<8x128xf32>
    %230 = arith.addf %227, %229 : vector<8x128xf32>
    %cst_46 = arith.constant dense<0xFF800000> : vector<8xf32>
    %231 = vector.multi_reduction <maximumf>, %230, %cst_46 [1] : vector<8x128xf32> to vector<8xf32>
    %232 = vector.shape_cast %231 : vector<8xf32> to vector<8x1xf32>
    %233 = vector.broadcast %232 : vector<8x1xf32> to vector<8x128xf32>
    %234 = arith.subf %230, %233 : vector<8x128xf32>
    %235 = math.exp %234 : vector<8x128xf32>
    %cst_47 = arith.constant dense<0.000000e+00> : vector<8xf32>
    %236 = vector.multi_reduction <add>, %235, %cst_47 [1] : vector<8x128xf32> to vector<8xf32>
    %237 = vector.shape_cast %236 : vector<8xf32> to vector<8x1xf32>
    %238 = vector.broadcast %237 : vector<8x1xf32> to vector<8x128xf32>
    %239 = arith.divf %235, %238 : vector<8x128xf32>
    %c0_48 = arith.constant 0 : index
    %c0_49 = arith.constant 0 : index
    %240 = vector.load %arg7[%c0_48, %c0_49] : memref<8x128xf32, #tpu.memory_space<vmem>>, vector<8x128xf32>
    tpu.vector_store %arg7[%c0_48, %c0_49], %239 {strides = array<i32>} : memref<8x128xf32, #tpu.memory_space<vmem>>, vector<8x128xf32>,
    return
  }
  func.func @transform_0(%arg0: i32) -> (i32, i32, i32) {
    %c0_i32 = arith.constant 0 : i32
    %c0_i32_0 = arith.constant 0 : i32
    %c0_i32_1 = arith.constant 0 : i32
    return %arg0, %c0_i32, %c0_i32_0 : i32, i32, i32
  }
  func.func @transform_1(%arg0: i32) -> (i32, i32) {
    %c0_i32 = arith.constant 0 : i32
    %c0_i32_0 = arith.constant 0 : i32
    %c0_i32_1 = arith.constant 0 : i32
    return %c0_i32, %c0_i32_0 : i32, i32
  }
  func.func @transform_2(%arg0: i32) -> (i32, i32) {
    %c0_i32 = arith.constant 0 : i32
    %c0_i32_0 = arith.constant 0 : i32
    %c0_i32_1 = arith.constant 0 : i32
    return %c0_i32, %c0_i32_0 : i32, i32
  }
  func.func @transform_3(%arg0: i32) -> (i32, i32) {
    %c0_i32 = arith.constant 0 : i32
    %c0_i32_0 = arith.constant 0 : i32
    %c0_i32_1 = arith.constant 0 : i32
    return %c0_i32, %c0_i32_0 : i32, i32
  }
  func.func @transform_4(%arg0: i32) -> (i32, i32) {
    %c0_i32 = arith.constant 0 : i32
    %c0_i32_0 = arith.constant 0 : i32
    %c0_i32_1 = arith.constant 0 : i32
    return %c0_i32, %c0_i32_0 : i32, i32
  }
  func.func @transform_5(%arg0: i32) -> (i32, i32) {
    %c0_i32 = arith.constant 0 : i32
    %c0_i32_0 = arith.constant 0 : i32
    %c0_i32_1 = arith.constant 0 : i32
    return %c0_i32, %c0_i32_0 : i32, i32
  }
  func.func @transform_6(%arg0: i32) -> (i32, i32) {
    %c0_i32 = arith.constant 0 : i32
    %c0_i32_0 = arith.constant 0 : i32
    return %arg0, %c0_i32 : i32, i32
  }
}

</mosaic_0001>

<llo_original>
// kernel: tpu_custom_call.1
$region0: #{tpu_custom_call.1}
  #allocation0 [shape = 'u32[]', space=smem, size = 0x4, offset = 0x4, fixed_abs, tag = 'smem constant byte address 0x4 - core index']
  #allocation1 [shape = 'u32[144,128]{1,0:T(1,128)}', space=vmem, size = 0x12000, scoped, tag = 'internal scratch']
  %s0 = inlined_call_operand.vmem [shape: f32[1,64,16], index: 0, kind: input, shape index: {}]
  %s1 = inlined_call_operand.vmem [shape: f32[16,512], index: 1, kind: input, shape index: {}]
  %s2 = inlined_call_operand.hbm [shape: f32[128,512], index: 2, kind: input, shape index: {}]
  %s3 = inlined_call_operand.vmem [shape: f32[1,512], index: 3, kind: input, shape index: {}]
  %s4 = inlined_call_operand.hbm [shape: f32[128,128], index: 4, kind: input, shape index: {}]
  %s5 = inlined_call_operand.vmem [shape: f32[1,128], index: 5, kind: input, shape index: {}]
  %s6 = inlined_call_operand.hbm [shape: f32[8,128], index: 6, kind: output, shape index: {}]
  %s7 = sld [smem:[#allocation0]]
  $region42: #{tpu_custom_call.1} parent=0
    _
  %s9 = ssub.s32 1, %s7
  %s10 = scalar_select 0, %s9, %s7
  $region1: #{tpu_custom_call.1} parent=0
    #allocation2 [shape = 'u8[262144]{0}', space=vmem, size = 0x40000, scoped, tag = 'input window, operand 2, single buffered']
    #allocation3 [shape = 's32[1]{0}', space=sflag, size = 0x4, scoped, tag = 'scoped memory for tpu_custom_call.1']
    #allocation4 [shape = 's32[1]{0}', space=sflag, size = 0x4, scoped, tag = 'scoped memory for tpu_custom_call.1']
    #allocation5 [shape = 'u8[65536]{0}', space=vmem, size = 0x10000, scoped, tag = 'input window, operand 4, single buffered']
    #allocation6 [shape = 's32[1]{0}', space=sflag, size = 0x4, scoped, tag = 'scoped memory for tpu_custom_call.1']
    #allocation7 [shape = 'u8[4096]{0}', space=vmem, size = 0x1000, scoped, tag = 'output window, operand 0, single buffered']
    %11 = vsyncpa [#allocation3], 0
    %12 = vsyncpa [#allocation6], 0
    %13 = vsyncpa [#allocation4], 0
    // Predicated region
    $region2: #{tpu_custom_call.1} parent=1 // pred_check
      _
    $region3: #{tpu_custom_call.1} parent=1 // pred_check_branch
      %15 = sbr.rel (0) target = $region5
    $region4: #{tpu_custom_call.1} parent=1 // pred_region
      _
    $region5: #{tpu_custom_call.1} parent=1 // pred_fallthru
      _
    // Predicated region
    $region6: #{tpu_custom_call.1} parent=1 // pred_check
      _
    $region7: #{tpu_custom_call.1} parent=1 // pred_check_branch
      %17 = sbr.rel (0) target = $region9
    $region8: #{tpu_custom_call.1} parent=1 // pred_region
      _
    $region9: #{tpu_custom_call.1} parent=1 // pred_fallthru
      _
    // Predicated region
    $region10: #{tpu_custom_call.1} parent=1 // pred_check
      _
    $region11: #{tpu_custom_call.1} parent=1 // pred_check_branch
      %19 = sbr.rel (0) target = $region13
    $region12: #{tpu_custom_call.1} parent=1 // pred_region
      %s21 = ssub.s32 8192, 8192
      %22 = vsyncadd [#allocation3], %s21
      %s23 = sshll.u32 [#allocation2], 4
      %s24 = int_to_ptr.vmem [resolvable:$true] %s23
      %29 = dma.hbm_to_vmem [thread:$0]  %s2, 8192, %s24, [#allocation3], 512, 512, 32
    $region13: #{tpu_custom_call.1} parent=1 // pred_fallthru
      _
    // Predicated region
    $region14: #{tpu_custom_call.1} parent=1 // pred_check
      _
    $region15: #{tpu_custom_call.1} parent=1 // pred_check_branch
      %31 = sbr.rel (0) target = $region17
    $region16: #{tpu_custom_call.1} parent=1 // pred_region
      _
    $region17: #{tpu_custom_call.1} parent=1 // pred_fallthru
      _
    // Predicated region
    $region18: #{tpu_custom_call.1} parent=1 // pred_check
      _
    $region19: #{tpu_custom_call.1} parent=1 // pred_check_branch
      %33 = sbr.rel (0) target = $region21
    $region20: #{tpu_custom_call.1} parent=1 // pred_region
      %s35 = ssub.s32 2048, 2048
      %36 = vsyncadd [#allocation6], %s35
      %s37 = sshll.u32 [#allocation5], 4
      %s38 = int_to_ptr.vmem [resolvable:$true] %s37
      %43 = dma.hbm_to_vmem [thread:$0]  %s4, 2048, %s38, [#allocation6], 128, 128, 8
    $region21: #{tpu_custom_call.1} parent=1 // pred_fallthru
      _
    // Predicated region
    $region22: #{tpu_custom_call.1} parent=1 // pred_check
      _
    $region23: #{tpu_custom_call.1} parent=1 // pred_check_branch
      %45 = sbr.rel (0) target = $region25
    $region24: #{tpu_custom_call.1} parent=1 // pred_region
      _
    $region25: #{tpu_custom_call.1} parent=1 // pred_fallthru
      _
    // Predicated region
    $region26: #{tpu_custom_call.1} parent=1 // pred_check
      _
    $region27: #{tpu_custom_call.1} parent=1 // pred_check_branch
      %47 = sbr.rel (0) target = $region29
    $region28: #{tpu_custom_call.1} parent=1 // pred_region
      %48 = dma.done [#allocation3], 8192
    $region29: #{tpu_custom_call.1} parent=1 // pred_fallthru
      _
    // Predicated region
    $region30: #{tpu_custom_call.1} parent=1 // pred_check
      _
    $region31: #{tpu_custom_call.1} parent=1 // pred_check_branch
      %50 = sbr.rel (0) target = $region33
    $region32: #{tpu_custom_call.1} parent=1 // pred_region
      %51 = dma.done [#allocation6], 2048
    $region33: #{tpu_custom_call.1} parent=1 // pred_fallthru
      _
    %v52 = vld [vmem:[%s0] sm:$0xff]
    %v53 = vld [vmem:[%s0 + $0x8] sm:$0xff]
    %v54 = vld [vmem:[%s0 + $0x10] sm:$0xff]
    %v55 = vld [vmem:[%s0 + $0x18] sm:$0xff]
    %v56 = vld [vmem:[%s0 + $0x20] sm:$0xff]
    %v57 = vld [vmem:[%s0 + $0x28] sm:$0xff]
    %v58 = vld [vmem:[%s0 + $0x30] sm:$0xff]
    %v59 = vld [vmem:[%s0 + $0x38] sm:$0xff]
    %v60 = vld [vmem:[#allocation2] sm:$0xff]
    %v61 = vld [vmem:[#allocation2 + $0x8] sm:$0xff]
    %v62 = vld [vmem:[#allocation2 + $0x10] sm:$0xff]
    %v63 = vld [vmem:[#allocation2 + $0x18] sm:$0xff]
    %v64 = vld [vmem:[#allocation2 + $0x20] sm:$0xff]
    %v65 = vld [vmem:[#allocation2 + $0x28] sm:$0xff]
    %v66 = vld [vmem:[#allocation2 + $0x30] sm:$0xff]
    %v67 = vld [vmem:[#allocation2 + $0x38] sm:$0xff]
    %v68 = vld [vmem:[#allocation2 + $0x40] sm:$0xff]
    %v69 = vld [vmem:[#allocation2 + $0x48] sm:$0xff]
    %v70 = vld [vmem:[#allocation2 + $0x50] sm:$0xff]
    %v71 = vld [vmem:[#allocation2 + $0x58] sm:$0xff]
    %v72 = vld [vmem:[#allocation2 + $0x60] sm:$0xff]
    %v73 = vld [vmem:[#allocation2 + $0x68] sm:$0xff]
    %v74 = vld [vmem:[#allocation2 + $0x70] sm:$0xff]
    %v75 = vld [vmem:[#allocation2 + $0x78] sm:$0xff]
    %v76 = vld [vmem:[#allocation2 + $0x80] sm:$0xff]
    %v77 = vld [vmem:[#allocation2 + $0x88] sm:$0xff]
    %v78 = vld [vmem:[#allocation2 + $0x90] sm:$0xff]
    %v79 = vld [vmem:[#allocation2 + $0x98] sm:$0xff]
    %v80 = vld [vmem:[#allocation2 + $0xa0] sm:$0xff]
    %v81 = vld [vmem:[#allocation2 + $0xa8] sm:$0xff]
    %v82 = vld [vmem:[#allocation2 + $0xb0] sm:$0xff]
    %v83 = vld [vmem:[#allocation2 + $0xb8] sm:$0xff]
    %v84 = vld [vmem:[#allocation2 + $0xc0] sm:$0xff]
    %v85 = vld [vmem:[#allocation2 + $0xc8] sm:$0xff]
    %v86 = vld [vmem:[#allocation2 + $0xd0] sm:$0xff]
    %v87 = vld [vmem:[#allocation2 + $0xd8] sm:$0xff]
    %v88 = vld [vmem:[#allocation2 + $0xe0] sm:$0xff]
    %v89 = vld [vmem:[#allocation2 + $0xe8] sm:$0xff]
    %v90 = vld [vmem:[#allocation2 + $0xf0] sm:$0xff]
    %v91 = vld [vmem:[#allocation2 + $0xf8] sm:$0xff]
    %v92 = vld [vmem:[#allocation2 + $0x100] sm:$0xff]
    %v93 = vld [vmem:[#allocation2 + $0x108] sm:$0xff]
    %v94 = vld [vmem:[#allocation2 + $0x110] sm:$0xff]
    %v95 = vld [vmem:[#allocation2 + $0x118] sm:$0xff]
    %v96 = vld [vmem:[#allocation2 + $0x120] sm:$0xff]
    %v97 = vld [vmem:[#allocation2 + $0x128] sm:$0xff]
    %v98 = vld [vmem:[#allocation2 + $0x130] sm:$0xff]
    %v99 = vld [vmem:[#allocation2 + $0x138] sm:$0xff]
    %v100 = vld [vmem:[#allocation2 + $0x140] sm:$0xff]
    %v101 = vld [vmem:[#allocation2 + $0x148] sm:$0xff]
    %v102 = vld [vmem:[#allocation2 + $0x150] sm:$0xff]
    %v103 = vld [vmem:[#allocation2 + $0x158] sm:$0xff]
    %v104 = vld [vmem:[#allocation2 + $0x160] sm:$0xff]
    %v105 = vld [vmem:[#allocation2 + $0x168] sm:$0xff]
    %v106 = vld [vmem:[#allocation2 + $0x170] sm:$0xff]
    %v107 = vld [vmem:[#allocation2 + $0x178] sm:$0xff]
    %v108 = vld [vmem:[#allocation2 + $0x180] sm:$0xff]
    %v109 = vld [vmem:[#allocation2 + $0x188] sm:$0xff]
    %v110 = vld [vmem:[#allocation2 + $0x190] sm:$0xff]
    %v111 = vld [vmem:[#allocation2 + $0x198] sm:$0xff]
    %v112 = vld [vmem:[#allocation2 + $0x1a0] sm:$0xff]
    %v113 = vld [vmem:[#allocation2 + $0x1a8] sm:$0xff]
    %v114 = vld [vmem:[#allocation2 + $0x1b0] sm:$0xff]
    %v115 = vld [vmem:[#allocation2 + $0x1b8] sm:$0xff]
    %v116 = vld [vmem:[#allocation2 + $0x1c0] sm:$0xff]
    %v117 = vld [vmem:[#allocation2 + $0x1c8] sm:$0xff]
    %v118 = vld [vmem:[#allocation2 + $0x1d0] sm:$0xff]
    %v119 = vld [vmem:[#allocation2 + $0x1d8] sm:$0xff]
    %v120 = vld [vmem:[#allocation2 + $0x1e0] sm:$0xff]
    %v121 = vld [vmem:[#allocation2 + $0x1e8] sm:$0xff]
    %v122 = vld [vmem:[#allocation2 + $0x1f0] sm:$0xff]
    %v123 = vld [vmem:[#allocation2 + $0x1f8] sm:$0xff]
    %v124 = vld [vmem:[%s1] sm:$0xff]
    %v125 = vld [vmem:[%s1 + $0x8] sm:$0xff]
    %v126 = vld [vmem:[%s1 + $0x10] sm:$0xff]
    %v127 = vld [vmem:[%s1 + $0x18] sm:$0xff]
    %v128 = vld [vmem:[%s1 + $0x20] sm:$0xff]
    %v129 = vld [vmem:[%s1 + $0x28] sm:$0xff]
    %v130 = vld [vmem:[%s1 + $0x30] sm:$0xff]
    %v131 = vld [vmem:[%s1 + $0x38] sm:$0xff]
    %v132 = vld [vmem:[%s3] sm:$0xf]
    %v134 = vlaneseq
    %v135 = vshrl.u32 %v134, 7
    %v136 = vsub.s32 0, %v135
    %v137 = vrot.slane %v132, %v136
    %v138 = vlaneseq
    %v139 = vshrl.u32 %v138, 7
    %v140 = vsub.s32 1, %v139
    %v141 = vrot.slane %v132, %v140
    %v142 = vlaneseq
    %v143 = vshrl.u32 %v142, 7
    %v144 = vsub.s32 2, %v143
    %v145 = vrot.slane %v132, %v144
    %v146 = vlaneseq
    %v147 = vshrl.u32 %v146, 7
    %v148 = vsub.s32 3, %v147
    %v149 = vrot.slane %v132, %v148
    %vm154 = vcmask 130048
    %v156 = vsel %vm154, %v52, 0
    %v159 = vsel %vm154, %v53, 0
    %v162 = vsel %vm154, %v54, 0
    %v165 = vsel %vm154, %v55, 0
    %v168 = vsel %vm154, %v56, 0
    %v171 = vsel %vm154, %v57, 0
    %v174 = vsel %vm154, %v58, 0
    %v177 = vsel %vm154, %v59, 0
    %179 = vmatprep.subr.mxu0 %v125
    %180 = vmatpush1.msra.mxu0 %v124
    %181 = vmatprep.subr.mxu0 %v129
    %182 = vmatpush1.msra.mxu0 %v128
    %183 = vmatprep.subr.mxu0 0.0
    %184 = vmatpush1.msra.mxu0 0.0
    %185 = vmatprep.subr.mxu0 0.0
    %186 = vmatpush1.msra.mxu0 0.0
    %187 = vmatprep.subr.mxu0 0.0
    %188 = vmatpush1.msra.mxu0 0.0
    %189 = vmatprep.subr.mxu0 0.0
    %190 = vmatpush1.msra.mxu0 0.0
    %191 = vmatprep.subr.mxu0 0.0
    %192 = vmatpush1.msra.mxu0 0.0
    %193 = vmatprep.subr.mxu0 0.0
    %194 = vmatpush1.msra.mxu0 0.0
    %195 = vmatprep.subr.mxu0 0.0
    %196 = vmatpush1.msra.mxu0 0.0
    %197 = vmatprep.subr.mxu0 0.0
    %198 = vmatpush1.msra.mxu0 0.0
    %199 = vmatprep.subr.mxu0 0.0
    %200 = vmatpush1.msra.mxu0 0.0
    %201 = vmatprep.subr.mxu0 0.0
    %202 = vmatpush1.msra.mxu0 0.0
    %203 = vmatprep.subr.mxu0 0.0
    %204 = vmatpush1.msra.mxu0 0.0
    %205 = vmatprep.subr.mxu0 0.0
    %206 = vmatpush1.msra.mxu0 0.0
    %207 = vmatprep.subr.mxu0 0.0
    %208 = vmatpush1.msra.mxu0 0.0
    %209 = vmatprep.subr.mxu0 0.0
    %210 = vmatpush1.msra.mxu0 0.0
    %211 = vmatprep.subr.mxu0 0.0
    %212 = vmatpush1.msra.mxu0 0.0
    %213 = vmatprep.subr.mxu0 0.0
    %214 = vmatpush1.msra.mxu0 0.0
    %215 = vmatprep.subr.mxu0 0.0
    %216 = vmatpush1.msra.mxu0 0.0
    %217 = vmatprep.subr.mxu0 0.0
    %218 = vmatpush1.msra.mxu0 0.0
    %219 = vmatprep.subr.mxu0 0.0
    %220 = vmatpush1.msra.mxu0 0.0
    %221 = vmatprep.subr.mxu0 0.0
    %222 = vmatpush1.msra.mxu0 0.0
    %223 = vmatprep.subr.mxu0 0.0
    %224 = vmatpush1.msra.mxu0 0.0
    %225 = vmatprep.subr.mxu0 0.0
    %226 = vmatpush1.msra.mxu0 0.0
    %227 = vmatprep.subr.mxu0 0.0
    %228 = vmatpush1.msra.mxu0 0.0
    %229 = vmatprep.subr.mxu0 0.0
    %230 = vmatpush1.msra.mxu0 0.0
    %231 = vmatprep.subr.mxu0 0.0
    %232 = vmatpush1.msra.mxu0 0.0
    %233 = vmatprep.subr.mxu0 0.0
    %234 = vmatpush1.msra.mxu0 0.0
    %235 = vmatprep.subr.mxu0 0.0
    %236 = vmatpush1.msra.mxu0 0.0
    %237 = vmatprep.subr.mxu0 0.0
    %238 = vmatpush1.msra.mxu0 0.0
    %239 = vmatprep.subr.mxu0 0.0
    %240 = vmatpush1.msra.mxu0 0.0
    %241 = vmatprep.subr.mxu0 0.0
    %242 = vmatpush1.msra.mxu0 0.0
    %243 = vmatprep.mubr.f32.mxu0 0.0
    %244 = vmatmul.mubr.f32.gmra.mrb[0].mxu0 %v156
    %v245 = vpop.f32.mrb[0].mxu0
    %v246 = vadd.f32 %v137, %v245
    %v247 = vpop.f32.mrb[0].mxu0
    %v248 = vadd.f32 %v141, %v247
    %249 = vmatprep.mubr.f32.mxu0 0.0
    %250 = vmatmul.mubr.f32.gmra.mrb[0].mxu0 %v159
    %v251 = vpop.f32.mrb[0].mxu0
    %v252 = vadd.f32 %v137, %v251
    %v253 = vpop.f32.mrb[0].mxu0
    %v254 = vadd.f32 %v141, %v253
    %255 = vmatprep.mubr.f32.mxu0 0.0
    %256 = vmatmul.mubr.f32.gmra.mrb[0].mxu0 %v162
    %v257 = vpop.f32.mrb[0].mxu0
    %v258 = vadd.f32 %v137, %v257
    %v259 = vpop.f32.mrb[0].mxu0
    %v260 = vadd.f32 %v141, %v259
    %261 = vmatprep.mubr.f32.mxu0 0.0
    %262 = vmatmul.mubr.f32.gmra.mrb[0].mxu0 %v165
    %v263 = vpop.f32.mrb[0].mxu0
    %v264 = vadd.f32 %v137, %v263
    %v265 = vpop.f32.mrb[0].mxu0
    %v266 = vadd.f32 %v141, %v265
    %267 = vmatprep.mubr.f32.mxu0 0.0
    %268 = vmatmul.mubr.f32.gmra.mrb[0].mxu0 %v168
    %v269 = vpop.f32.mrb[0].mxu0
    %v270 = vadd.f32 %v137, %v269
    %v271 = vpop.f32.mrb[0].mxu0
    %v272 = vadd.f32 %v141, %v271
    %273 = vmatprep.mubr.f32.mxu0 0.0
    %274 = vmatmul.mubr.f32.gmra.mrb[0].mxu0 %v171
    %v275 = vpop.f32.mrb[0].mxu0
    %v276 = vadd.f32 %v137, %v275
    %v277 = vpop.f32.mrb[0].mxu0
    %v278 = vadd.f32 %v141, %v277
    %279 = vmatprep.mubr.f32.mxu0 0.0
    %280 = vmatmul.mubr.f32.gmra.mrb[0].mxu0 %v174
    %v281 = vpop.f32.mrb[0].mxu0
    %v282 = vadd.f32 %v137, %v281
    %v283 = vpop.f32.mrb[0].mxu0
    %v284 = vadd.f32 %v141, %v283
    %285 = vmatprep.mubr.f32.mxu0 0.0
    %286 = vmatmul.mubr.f32.gmra.mrb[0].mxu0 %v177
    %v287 = vpop.f32.mrb[0].mxu0
    %v288 = vadd.f32 %v137, %v287
    %v289 = vpop.f32.mrb[0].mxu0
    %v290 = vadd.f32 %v141, %v289
    %291 = vdwg.mxu0
    %292 = vmatprep.subr.mxu0 %v127
    %293 = vmatpush1.msra.mxu0 %v126
    %294 = vmatprep.subr.mxu0 %v131
    %295 = vmatpush1.msra.mxu0 %v130
    %296 = vmatprep.subr.mxu0 0.0
    %297 = vmatpush1.msra.mxu0 0.0
    %298 = vmatprep.subr.mxu0 0.0
    %299 = vmatpush1.msra.mxu0 0.0
    %300 = vmatprep.subr.mxu0 0.0
    %301 = vmatpush1.msra.mxu0 0.0
    %302 = vmatprep.subr.mxu0 0.0
    %303 = vmatpush1.msra.mxu0 0.0
    %304 = vmatprep.subr.mxu0 0.0
    %305 = vmatpush1.msra.mxu0 0.0
    %306 = vmatprep.subr.mxu0 0.0
    %307 = vmatpush1.msra.mxu0 0.0
    %308 = vmatprep.subr.mxu0 0.0
    %309 = vmatpush1.msra.mxu0 0.0
    %310 = vmatprep.subr.mxu0 0.0
    %311 = vmatpush1.msra.mxu0 0.0
    %312 = vmatprep.subr.mxu0 0.0
    %313 = vmatpush1.msra.mxu0 0.0
    %314 = vmatprep.subr.mxu0 0.0
    %315 = vmatpush1.msra.mxu0 0.0
    %316 = vmatprep.subr.mxu0 0.0
    %317 = vmatpush1.msra.mxu0 0.0
    %318 = vmatprep.subr.mxu0 0.0
    %319 = vmatpush1.msra.mxu0 0.0
    %320 = vmatprep.subr.mxu0 0.0
    %321 = vmatpush1.msra.mxu0 0.0
    %322 = vmatprep.subr.mxu0 0.0
    %323 = vmatpush1.msra.mxu0 0.0
    %324 = vmatprep.subr.mxu0 0.0
    %325 = vmatpush1.msra.mxu0 0.0
    %326 = vmatprep.subr.mxu0 0.0
    %327 = vmatpush1.msra.mxu0 0.0
    %328 = vmatprep.subr.mxu0 0.0
    %329 = vmatpush1.msra.mxu0 0.0
    %330 = vmatprep.subr.mxu0 0.0
    %331 = vmatpush1.msra.mxu0 0.0
    %332 = vmatprep.subr.mxu0 0.0
    %333 = vmatpush1.msra.mxu0 0.0
    %334 = vmatprep.subr.mxu0 0.0
    %335 = vmatpush1.msra.mxu0 0.0
    %336 = vmatprep.subr.mxu0 0.0
    %337 = vmatpush1.msra.mxu0 0.0
    %338 = vmatprep.subr.mxu0 0.0
    %339 = vmatpush1.msra.mxu0 0.0
    %340 = vmatprep.subr.mxu0 0.0
    %341 = vmatpush1.msra.mxu0 0.0
    %342 = vmatprep.subr.mxu0 0.0
    %343 = vmatpush1.msra.mxu0 0.0
    %344 = vmatprep.subr.mxu0 0.0
    %345 = vmatpush1.msra.mxu0 0.0
    %346 = vmatprep.subr.mxu0 0.0
    %347 = vmatpush1.msra.mxu0 0.0
    %348 = vmatprep.subr.mxu0 0.0
    %349 = vmatpush1.msra.mxu0 0.0
    %350 = vmatprep.subr.mxu0 0.0
    %351 = vmatpush1.msra.mxu0 0.0
    %352 = vmatprep.subr.mxu0 0.0
    %353 = vmatpush1.msra.mxu0 0.0
    %354 = vmatprep.subr.mxu0 0.0
    %355 = vmatpush1.msra.mxu0 0.0
    %356 = vmatprep.mubr.f32.mxu0 0.0
    %357 = vmatmul.mubr.f32.gmra.mrb[0].mxu0 %v156
    %v358 = vpop.f32.mrb[0].mxu0
    %v359 = vadd.f32 %v145, %v358
    %v360 = vpop.f32.mrb[0].mxu0
    %v361 = vadd.f32 %v149, %v360
    %362 = vmatprep.mubr.f32.mxu0 0.0
    %363 = vmatmul.mubr.f32.gmra.mrb[0].mxu0 %v159
    %v364 = vpop.f32.mrb[0].mxu0
    %v365 = vadd.f32 %v145, %v364
    %v366 = vpop.f32.mrb[0].mxu0
    %v367 = vadd.f32 %v149, %v366
    %368 = vmatprep.mubr.f32.mxu0 0.0
    %369 = vmatmul.mubr.f32.gmra.mrb[0].mxu0 %v162
    %v370 = vpop.f32.mrb[0].mxu0
    %v371 = vadd.f32 %v145, %v370
    %v372 = vpop.f32.mrb[0].mxu0
    %v373 = vadd.f32 %v149, %v372
    %374 = vmatprep.mubr.f32.mxu0 0.0
    %375 = vmatmul.mubr.f32.gmra.mrb[0].mxu0 %v165
    %v376 = vpop.f32.mrb[0].mxu0
    %v377 = vadd.f32 %v145, %v376
    %v378 = vpop.f32.mrb[0].mxu0
    %v379 = vadd.f32 %v149, %v378
    %380 = vmatprep.mubr.f32.mxu0 0.0
    %381 = vmatmul.mubr.f32.gmra.mrb[0].mxu0 %v168
    %v382 = vpop.f32.mrb[0].mxu0
    %v383 = vadd.f32 %v145, %v382
    %v384 = vpop.f32.mrb[0].mxu0
    %v385 = vadd.f32 %v149, %v384
    %386 = vmatprep.mubr.f32.mxu0 0.0
    %387 = vmatmul.mubr.f32.gmra.mrb[0].mxu0 %v171
    %v388 = vpop.f32.mrb[0].mxu0
    %v389 = vadd.f32 %v145, %v388
    %v390 = vpop.f32.mrb[0].mxu0
    %v391 = vadd.f32 %v149, %v390
    %392 = vmatprep.mubr.f32.mxu0 0.0
    %393 = vmatmul.mubr.f32.gmra.mrb[0].mxu0 %v174
    %v394 = vpop.f32.mrb[0].mxu0
    %v395 = vadd.f32 %v145, %v394
    %v396 = vpop.f32.mrb[0].mxu0
    %v397 = vadd.f32 %v149, %v396
    %398 = vmatprep.mubr.f32.mxu0 0.0
    %399 = vmatmul.mubr.f32.gmra.mrb[0].mxu0 %v177
    %v400 = vpop.f32.mrb[0].mxu0
    %v401 = vadd.f32 %v145, %v400
    %v402 = vpop.f32.mrb[0].mxu0
    %403 = vdwg.mxu0
    %404 = vmatprep.subr.mxu0 %v61
    %405 = vmatpush1.msra.mxu0 %v60
    %406 = vmatprep.subr.mxu0 %v65
    %407 = vmatpush1.msra.mxu0 %v64
    %408 = vmatprep.subr.mxu0 %v69
    %409 = vmatpush1.msra.mxu0 %v68
    %410 = vmatprep.subr.mxu0 %v73
    %411 = vmatpush1.msra.mxu0 %v72
    %412 = vmatprep.subr.mxu0 %v77
    %413 = vmatpush1.msra.mxu0 %v76
    %414 = vmatprep.subr.mxu0 %v81
    %415 = vmatpush1.msra.mxu0 %v80
    %416 = vmatprep.subr.mxu0 %v85
    %417 = vmatpush1.msra.mxu0 %v84
    %418 = vmatprep.subr.mxu0 %v89
    %419 = vmatpush1.msra.mxu0 %v88
    %420 = vmatprep.subr.mxu0 %v93
    %421 = vmatpush1.msra.mxu0 %v92
    %422 = vmatprep.subr.mxu0 %v97
    %423 = vmatpush1.msra.mxu0 %v96
    %424 = vmatprep.subr.mxu0 %v101
    %425 = vmatpush1.msra.mxu0 %v100
    %426 = vmatprep.subr.mxu0 %v105
    %427 = vmatpush1.msra.mxu0 %v104
    %428 = vmatprep.subr.mxu0 %v109
    %429 = vmatpush1.msra.mxu0 %v108
    %430 = vmatprep.subr.mxu0 %v113
    %431 = vmatpush1.msra.mxu0 %v112
    %432 = vmatprep.subr.mxu0 %v117
    %433 = vmatpush1.msra.mxu0 %v116
    %434 = vmatprep.subr.mxu0 %v121
    %435 = vmatpush1.msra.mxu0 %v120
    %436 = vmatprep.subr.mxu0 0.0
    %437 = vmatpush1.msra.mxu0 0.0
    %438 = vmatprep.subr.mxu0 0.0
    %439 = vmatpush1.msra.mxu0 0.0
    %440 = vmatprep.subr.mxu0 0.0
    %441 = vmatpush1.msra.mxu0 0.0
    %442 = vmatprep.subr.mxu0 0.0
    %443 = vmatpush1.msra.mxu0 0.0
    %444 = vmatprep.subr.mxu0 0.0
    %445 = vmatpush1.msra.mxu0 0.0
    %446 = vmatprep.subr.mxu0 0.0
    %447 = vmatpush1.msra.mxu0 0.0
    %448 = vmatprep.subr.mxu0 0.0
    %449 = vmatpush1.msra.mxu0 0.0
    %450 = vmatprep.subr.mxu0 0.0
    %451 = vmatpush1.msra.mxu0 0.0
    %452 = vmatprep.subr.mxu0 0.0
    %453 = vmatpush1.msra.mxu0 0.0
    %454 = vmatprep.subr.mxu0 0.0
    %455 = vmatpush1.msra.mxu0 0.0
    %456 = vmatprep.subr.mxu0 0.0
    %457 = vmatpush1.msra.mxu0 0.0
    %458 = vmatprep.subr.mxu0 0.0
    %459 = vmatpush1.msra.mxu0 0.0
    %460 = vmatprep.subr.mxu0 0.0
    %461 = vmatpush1.msra.mxu0 0.0
    %462 = vmatprep.subr.mxu0 0.0
    %463 = vmatpush1.msra.mxu0 0.0
    %464 = vmatprep.subr.mxu0 0.0
    %465 = vmatpush1.msra.mxu0 0.0
    %466 = vmatprep.subr.mxu0 0.0
    %467 = vmatpush1.msra.mxu0 0.0
    %468 = vmatprep.mubr.f32.mxu0 0.0
    %469 = vmatmul.mubr.f32.gmra.mrb[0].mxu0 0.0
    %v470 = vpop.f32.mrb[0].mxu0
    %v471 = vadd.f32 0.0, %v470
    %v472 = vpop.f32.mrb[0].mxu0
    %v473 = vadd.f32 0.0, %v472
    %474 = vdwg.mxu0
    %475 = vmatprep.subr.mxu0 %v63
    %476 = vmatpush1.msra.mxu0 %v62
    %477 = vmatprep.subr.mxu0 %v67
    %478 = vmatpush1.msra.mxu0 %v66
    %479 = vmatprep.subr.mxu0 %v71
    %480 = vmatpush1.msra.mxu0 %v70
    %481 = vmatprep.subr.mxu0 %v75
    %482 = vmatpush1.msra.mxu0 %v74
    %483 = vmatprep.subr.mxu0 %v79
    %484 = vmatpush1.msra.mxu0 %v78
    %485 = vmatprep.subr.mxu0 %v83
    %486 = vmatpush1.msra.mxu0 %v82
    %487 = vmatprep.subr.mxu0 %v87
    %488 = vmatpush1.msra.mxu0 %v86
    %489 = vmatprep.subr.mxu0 %v91
    %490 = vmatpush1.msra.mxu0 %v90
    %491 = vmatprep.subr.mxu0 %v95
    %492 = vmatpush1.msra.mxu0 %v94
    %493 = vmatprep.subr.mxu0 %v99
    %494 = vmatpush1.msra.mxu0 %v98
    %495 = vmatprep.subr.mxu0 %v103
    %496 = vmatpush1.msra.mxu0 %v102
    %497 = vmatprep.subr.mxu0 %v107
    %498 = vmatpush1.msra.mxu0 %v106
    %499 = vmatprep.subr.mxu0 %v111
    %500 = vmatpush1.msra.mxu0 %v110
    %501 = vmatprep.subr.mxu0 %v115
    %502 = vmatpush1.msra.mxu0 %v114
    %503 = vmatprep.subr.mxu0 %v119
    %504 = vmatpush1.msra.mxu0 %v118
    %505 = vmatprep.subr.mxu0 %v123
    %506 = vmatpush1.msra.mxu0 %v122
    %507 = vmatprep.subr.mxu0 0.0
    %508 = vmatpush1.msra.mxu0 0.0
    %509 = vmatprep.subr.mxu0 0.0
    %510 = vmatpush1.msra.mxu0 0.0
    %511 = vmatprep.subr.mxu0 0.0
    %512 = vmatpush1.msra.mxu0 0.0
    %513 = vmatprep.subr.mxu0 0.0
    %514 = vmatpush1.msra.mxu0 0.0
    %515 = vmatprep.subr.mxu0 0.0
    %516 = vmatpush1.msra.mxu0 0.0
    %517 = vmatprep.subr.mxu0 0.0
    %518 = vmatpush1.msra.mxu0 0.0
    %519 = vmatprep.subr.mxu0 0.0
    %520 = vmatpush1.msra.mxu0 0.0
    %521 = vmatprep.subr.mxu0 0.0
    %522 = vmatpush1.msra.mxu0 0.0
    %523 = vmatprep.subr.mxu0 0.0
    %524 = vmatpush1.msra.mxu0 0.0
    %525 = vmatprep.subr.mxu0 0.0
    %526 = vmatpush1.msra.mxu0 0.0
    %527 = vmatprep.subr.mxu0 0.0
    %528 = vmatpush1.msra.mxu0 0.0
    %529 = vmatprep.subr.mxu0 0.0
    %530 = vmatpush1.msra.mxu0 0.0
    %531 = vmatprep.subr.mxu0 0.0
    %532 = vmatpush1.msra.mxu0 0.0
    %533 = vmatprep.subr.mxu0 0.0
    %534 = vmatpush1.msra.mxu0 0.0
    %535 = vmatprep.subr.mxu0 0.0
    %536 = vmatpush1.msra.mxu0 0.0
    %537 = vmatprep.subr.mxu0 0.0
    %538 = vmatpush1.msra.mxu0 0.0
    %539 = vmatprep.mubr.f32.mxu0 0.0
    %540 = vmatmul.mubr.f32.gmra.mrb[0].mxu0 0.0
    %v541 = vpop.f32.mrb[0].mxu0
    %v542 = vadd.f32 0.0, %v541
    %v543 = vpop.f32.mrb[0].mxu0
    %v544 = vadd.f32 0.0, %v543
    %545 = vdwg.mxu0
    %v546 = vadd.f32 %v246, %v471
    %v547 = vadd.f32 %v248, %v473
    %v548 = vadd.f32 %v359, %v542
    %v549 = vadd.f32 %v361, %v544
    %v550 = vxor.u32 %v546, 2147483648
    %v551 = vmul.f32 %v550, 1.442695
    %v552 = vpow.pop %v551
    %v553 = vadd.f32 %v552, 1.0
    %v554 = vrcp.pop %v553
    %v555 = vmul.f32 1.0, %v554
    %v556 = vxor.u32 %v547, 2147483648
    %v557 = vmul.f32 %v556, 1.442695
    %v558 = vpow.pop %v557
    %v559 = vadd.f32 %v558, 1.0
    %v560 = vrcp.pop %v559
    %v561 = vmul.f32 1.0, %v560
    %v562 = vtanh.pop %v548
    %v563 = vxor.u32 %v549, 2147483648
    %v564 = vmul.f32 %v563, 1.442695
    %v565 = vpow.pop %v564
    %v566 = vadd.f32 %v565, 1.0
    %v567 = vrcp.pop %v566
    %v568 = vmul.f32 1.0, %v567
    %v569 = vmul.f32 %v561, 0.0
    %v570 = vmul.f32 %v555, %v562
    %v571 = vadd.f32 %v569, %v570
    %v572 = vtanh.pop %v571
    %v573 = vmul.f32 %v568, %v572
    %574 = vmatprep.subr.mxu0 %v61
    %575 = vmatpush1.msra.mxu0 %v60
    %576 = vmatprep.subr.mxu0 %v65
    %577 = vmatpush1.msra.mxu0 %v64
    %578 = vmatprep.subr.mxu0 %v69
    %579 = vmatpush1.msra.mxu0 %v68
    %580 = vmatprep.subr.mxu0 %v73
    %581 = vmatpush1.msra.mxu0 %v72
    %582 = vmatprep.subr.mxu0 %v77
    %583 = vmatpush1.msra.mxu0 %v76
    %584 = vmatprep.subr.mxu0 %v81
    %585 = vmatpush1.msra.mxu0 %v80
    %586 = vmatprep.subr.mxu0 %v85
    %587 = vmatpush1.msra.mxu0 %v84
    %588 = vmatprep.subr.mxu0 %v89
    %589 = vmatpush1.msra.mxu0 %v88
    %590 = vmatprep.subr.mxu0 %v93
    %591 = vmatpush1.msra.mxu0 %v92
    %592 = vmatprep.subr.mxu0 %v97
    %593 = vmatpush1.msra.mxu0 %v96
    %594 = vmatprep.subr.mxu0 %v101
    %595 = vmatpush1.msra.mxu0 %v100
    %596 = vmatprep.subr.mxu0 %v105
    %597 = vmatpush1.msra.mxu0 %v104
    %598 = vmatprep.subr.mxu0 %v109
    %599 = vmatpush1.msra.mxu0 %v108
    %600 = vmatprep.subr.mxu0 %v113
    %601 = vmatpush1.msra.mxu0 %v112
    %602 = vmatprep.subr.mxu0 %v117
    %603 = vmatpush1.msra.mxu0 %v116
    %604 = vmatprep.subr.mxu0 %v121
    %605 = vmatpush1.msra.mxu0 %v120
    %606 = vmatprep.subr.mxu0 0.0
    %607 = vmatpush1.msra.mxu0 0.0
    %608 = vmatprep.subr.mxu0 0.0
    %609 = vmatpush1.msra.mxu0 0.0
    %610 = vmatprep.subr.mxu0 0.0
    %611 = vmatpush1.msra.mxu0 0.0
    %612 = vmatprep.subr.mxu0 0.0
    %613 = vmatpush1.msra.mxu0 0.0
    %614 = vmatprep.subr.mxu0 0.0
    %615 = vmatpush1.msra.mxu0 0.0
    %616 = vmatprep.subr.mxu0 0.0
    %617 = vmatpush1.msra.mxu0 0.0
    %618 = vmatprep.subr.mxu0 0.0
    %619 = vmatpush1.msra.mxu0 0.0
    %620 = vmatprep.subr.mxu0 0.0
    %621 = vmatpush1.msra.mxu0 0.0
    %622 = vmatprep.subr.mxu0 0.0
    %623 = vmatpush1.msra.mxu0 0.0
    %624 = vmatprep.subr.mxu0 0.0
    %625 = vmatpush1.msra.mxu0 0.0
    %626 = vmatprep.subr.mxu0 0.0
    %627 = vmatpush1.msra.mxu0 0.0
    %628 = vmatprep.subr.mxu0 0.0
    %629 = vmatpush1.msra.mxu0 0.0
    %630 = vmatprep.subr.mxu0 0.0
    %631 = vmatpush1.msra.mxu0 0.0
    %632 = vmatprep.subr.mxu0 0.0
    %633 = vmatpush1.msra.mxu0 0.0
    %634 = vmatprep.subr.mxu0 0.0
    %635 = vmatpush1.msra.mxu0 0.0
    %636 = vmatprep.subr.mxu0 0.0
    %637 = vmatpush1.msra.mxu0 0.0
    %638 = vmatprep.mubr.f32.mxu0 0.0
    %639 = vmatmul.mubr.f32.gmra.mrb[0].mxu0 %v573
    %v640 = vpop.f32.mrb[0].mxu0
    %v641 = vadd.f32 0.0, %v640
    %v642 = vpop.f32.mrb[0].mxu0
    %v643 = vadd.f32 0.0, %v642
    %644 = vdwg.mxu0
    %645 = vmatprep.subr.mxu0 %v63
    %646 = vmatpush1.msra.mxu0 %v62
    %647 = vmatprep.subr.mxu0 %v67
    %648 = vmatpush1.msra.mxu0 %v66
    %649 = vmatprep.subr.mxu0 %v71
    %650 = vmatpush1.msra.mxu0 %v70
    %651 = vmatprep.subr.mxu0 %v75
    %652 = vmatpush1.msra.mxu0 %v74
    %653 = vmatprep.subr.mxu0 %v79
    %654 = vmatpush1.msra.mxu0 %v78
    %655 = vmatprep.subr.mxu0 %v83
    %656 = vmatpush1.msra.mxu0 %v82
    %657 = vmatprep.subr.mxu0 %v87
    %658 = vmatpush1.msra.mxu0 %v86
    %659 = vmatprep.subr.mxu0 %v91
    %660 = vmatpush1.msra.mxu0 %v90
    %661 = vmatprep.subr.mxu0 %v95
    %662 = vmatpush1.msra.mxu0 %v94
    %663 = vmatprep.subr.mxu0 %v99
    %664 = vmatpush1.msra.mxu0 %v98
    %665 = vmatprep.subr.mxu0 %v103
    %666 = vmatpush1.msra.mxu0 %v102
    %667 = vmatprep.subr.mxu0 %v107
    %668 = vmatpush1.msra.mxu0 %v106
    %669 = vmatprep.subr.mxu0 %v111
    %670 = vmatpush1.msra.mxu0 %v110
    %671 = vmatprep.subr.mxu0 %v115
    %672 = vmatpush1.msra.mxu0 %v114
    %673 = vmatprep.subr.mxu0 %v119
    %674 = vmatpush1.msra.mxu0 %v118
    %675 = vmatprep.subr.mxu0 %v123
    %676 = vmatpush1.msra.mxu0 %v122
    %677 = vmatprep.subr.mxu0 0.0
    %678 = vmatpush1.msra.mxu0 0.0
    %679 = vmatprep.subr.mxu0 0.0
    %680 = vmatpush1.msra.mxu0 0.0
    %681 = vmatprep.subr.mxu0 0.0
    %682 = vmatpush1.msra.mxu0 0.0
    %683 = vmatprep.subr.mxu0 0.0
    %684 = vmatpush1.msra.mxu0 0.0
    %685 = vmatprep.subr.mxu0 0.0
    %686 = vmatpush1.msra.mxu0 0.0
    %687 = vmatprep.subr.mxu0 0.0
    %688 = vmatpush1.msra.mxu0 0.0
    %689 = vmatprep.subr.mxu0 0.0
    %690 = vmatpush1.msra.mxu0 0.0
    %691 = vmatprep.subr.mxu0 0.0
    %692 = vmatpush1.msra.mxu0 0.0
    %693 = vmatprep.subr.mxu0 0.0
    %694 = vmatpush1.msra.mxu0 0.0
    %695 = vmatprep.subr.mxu0 0.0
    %696 = vmatpush1.msra.mxu0 0.0
    %697 = vmatprep.subr.mxu0 0.0
    %698 = vmatpush1.msra.mxu0 0.0
    %699 = vmatprep.subr.mxu0 0.0
    %700 = vmatpush1.msra.mxu0 0.0
    %701 = vmatprep.subr.mxu0 0.0
    %702 = vmatpush1.msra.mxu0 0.0
    %703 = vmatprep.subr.mxu0 0.0
    %704 = vmatpush1.msra.mxu0 0.0
    %705 = vmatprep.subr.mxu0 0.0
    %706 = vmatpush1.msra.mxu0 0.0
    %707 = vmatprep.subr.mxu0 0.0
    %708 = vmatpush1.msra.mxu0 0.0
    %709 = vmatprep.mubr.f32.mxu0 0.0
    %710 = vmatmul.mubr.f32.gmra.mrb[0].mxu0 %v573
    %v711 = vpop.f32.mrb[0].mxu0
    %v712 = vadd.f32 0.0, %v711
    %v713 = vpop.f32.mrb[0].mxu0
    %v714 = vadd.f32 0.0, %v713
    %715 = vdwg.mxu0
    %v716 = vadd.f32 %v252, %v641
    %v717 = vadd.f32 %v254, %v643
    %v718 = vadd.f32 %v365, %v712
    %v719 = vadd.f32 %v367, %v714
    %v720 = vxor.u32 %v716, 2147483648
    %v721 = vmul.f32 %v720, 1.442695
    %v722 = vpow.pop %v721
    %v723 = vadd.f32 %v722, 1.0
    %v724 = vrcp.pop %v723
    %v725 = vmul.f32 1.0, %v724
    %v726 = vxor.u32 %v717, 2147483648
    %v727 = vmul.f32 %v726, 1.442695
    %v728 = vpow.pop %v727
    %v729 = vadd.f32 %v728, 1.0
    %v730 = vrcp.pop %v729
    %v731 = vmul.f32 1.0, %v730
    %v732 = vtanh.pop %v718
    %v733 = vxor.u32 %v719, 2147483648
    %v734 = vmul.f32 %v733, 1.442695
    %v735 = vpow.pop %v734
    %v736 = vadd.f32 %v735, 1.0
    %v737 = vrcp.pop %v736
    %v738 = vmul.f32 1.0, %v737
    %v739 = vmul.f32 %v731, %v571
    %v740 = vmul.f32 %v725, %v732
    %v741 = vadd.f32 %v739, %v740
    %v742 = vtanh.pop %v741
    %v743 = vmul.f32 %v738, %v742
    %744 = vmatprep.subr.mxu0 %v61
    %745 = vmatpush1.msra.mxu0 %v60
    %746 = vmatprep.subr.mxu0 %v65
    %747 = vmatpush1.msra.mxu0 %v64
    %748 = vmatprep.subr.mxu0 %v69
    %749 = vmatpush1.msra.mxu0 %v68
    %750 = vmatprep.subr.mxu0 %v73
    %751 = vmatpush1.msra.mxu0 %v72
    %752 = vmatprep.subr.mxu0 %v77
    %753 = vmatpush1.msra.mxu0 %v76
    %754 = vmatprep.subr.mxu0 %v81
    %755 = vmatpush1.msra.mxu0 %v80
    %756 = vmatprep.subr.mxu0 %v85
    %757 = vmatpush1.msra.mxu0 %v84
    %758 = vmatprep.subr.mxu0 %v89
    %759 = vmatpush1.msra.mxu0 %v88
    %760 = vmatprep.subr.mxu0 %v93
    %761 = vmatpush1.msra.mxu0 %v92
    %762 = vmatprep.subr.mxu0 %v97
    %763 = vmatpush1.msra.mxu0 %v96
    %764 = vmatprep.subr.mxu0 %v101
    %765 = vmatpush1.msra.mxu0 %v100
    %766 = vmatprep.subr.mxu0 %v105
    %767 = vmatpush1.msra.mxu0 %v104
    %768 = vmatprep.subr.mxu0 %v109
    %769 = vmatpush1.msra.mxu0 %v108
    %770 = vmatprep.subr.mxu0 %v113
    %771 = vmatpush1.msra.mxu0 %v112
    %772 = vmatprep.subr.mxu0 %v117
    %773 = vmatpush1.msra.mxu0 %v116
    %774 = vmatprep.subr.mxu0 %v121
    %775 = vmatpush1.msra.mxu0 %v120
    %776 = vmatprep.subr.mxu0 0.0
    %777 = vmatpush1.msra.mxu0 0.0
    %778 = vmatprep.subr.mxu0 0.0
    %779 = vmatpush1.msra.mxu0 0.0
    %780 = vmatprep.subr.mxu0 0.0
    %781 = vmatpush1.msra.mxu0 0.0
    %782 = vmatprep.subr.mxu0 0.0
    %783 = vmatpush1.msra.mxu0 0.0
    %784 = vmatprep.subr.mxu0 0.0
    %785 = vmatpush1.msra.mxu0 0.0
    %786 = vmatprep.subr.mxu0 0.0
    %787 = vmatpush1.msra.mxu0 0.0
    %788 = vmatprep.subr.mxu0 0.0
    %789 = vmatpush1.msra.mxu0 0.0
    %790 = vmatprep.subr.mxu0 0.0
    %791 = vmatpush1.msra.mxu0 0.0
    %792 = vmatprep.subr.mxu0 0.0
    %793 = vmatpush1.msra.mxu0 0.0
    %794 = vmatprep.subr.mxu0 0.0
    %795 = vmatpush1.msra.mxu0 0.0
    %796 = vmatprep.subr.mxu0 0.0
    %797 = vmatpush1.msra.mxu0 0.0
    %798 = vmatprep.subr.mxu0 0.0
    %799 = vmatpush1.msra.mxu0 0.0
    %800 = vmatprep.subr.mxu0 0.0
    %801 = vmatpush1.msra.mxu0 0.0
    %802 = vmatprep.subr.mxu0 0.0
    %803 = vmatpush1.msra.mxu0 0.0
    %804 = vmatprep.subr.mxu0 0.0
    %805 = vmatpush1.msra.mxu0 0.0
    %806 = vmatprep.subr.mxu0 0.0
    %807 = vmatpush1.msra.mxu0 0.0
    %808 = vmatprep.mubr.f32.mxu0 0.0
    %809 = vmatmul.mubr.f32.gmra.mrb[0].mxu0 %v743
    %v810 = vpop.f32.mrb[0].mxu0
    %v811 = vadd.f32 0.0, %v810
    %v812 = vpop.f32.mrb[0].mxu0
    %v813 = vadd.f32 0.0, %v812
    %814 = vdwg.mxu0
    %815 = vmatprep.subr.mxu0 %v63
    %816 = vmatpush1.msra.mxu0 %v62
    %817 = vmatprep.subr.mxu0 %v67
    %818 = vmatpush1.msra.mxu0 %v66
    %819 = vmatprep.subr.mxu0 %v71
    %820 = vmatpush1.msra.mxu0 %v70
    %821 = vmatprep.subr.mxu0 %v75
    %822 = vmatpush1.msra.mxu0 %v74
    %823 = vmatprep.subr.mxu0 %v79
    %824 = vmatpush1.msra.mxu0 %v78
    %825 = vmatprep.subr.mxu0 %v83
    %826 = vmatpush1.msra.mxu0 %v82
    %827 = vmatprep.subr.mxu0 %v87
    %828 = vmatpush1.msra.mxu0 %v86
    %829 = vmatprep.subr.mxu0 %v91
    %830 = vmatpush1.msra.mxu0 %v90
    %831 = vmatprep.subr.mxu0 %v95
    %832 = vmatpush1.msra.mxu0 %v94
    %833 = vmatprep.subr.mxu0 %v99
    %834 = vmatpush1.msra.mxu0 %v98
    %835 = vmatprep.subr.mxu0 %v103
    %836 = vmatpush1.msra.mxu0 %v102
    %837 = vmatprep.subr.mxu0 %v107
    %838 = vmatpush1.msra.mxu0 %v106
    %839 = vmatprep.subr.mxu0 %v111
    %840 = vmatpush1.msra.mxu0 %v110
    %841 = vmatprep.subr.mxu0 %v115
    %842 = vmatpush1.msra.mxu0 %v114
    %843 = vmatprep.subr.mxu0 %v119
    %844 = vmatpush1.msra.mxu0 %v118
    %845 = vmatprep.subr.mxu0 %v123
    %846 = vmatpush1.msra.mxu0 %v122
    %847 = vmatprep.subr.mxu0 0.0
    %848 = vmatpush1.msra.mxu0 0.0
    %849 = vmatprep.subr.mxu0 0.0
    %850 = vmatpush1.msra.mxu0 0.0
    %851 = vmatprep.subr.mxu0 0.0
    %852 = vmatpush1.msra.mxu0 0.0
    %853 = vmatprep.subr.mxu0 0.0
    %854 = vmatpush1.msra.mxu0 0.0
    %855 = vmatprep.subr.mxu0 0.0
    %856 = vmatpush1.msra.mxu0 0.0
    %857 = vmatprep.subr.mxu0 0.0
    %858 = vmatpush1.msra.mxu0 0.0
    %859 = vmatprep.subr.mxu0 0.0
    %860 = vmatpush1.msra.mxu0 0.0
    %861 = vmatprep.subr.mxu0 0.0
    %862 = vmatpush1.msra.mxu0 0.0
    %863 = vmatprep.subr.mxu0 0.0
    %864 = vmatpush1.msra.mxu0 0.0
    %865 = vmatprep.subr.mxu0 0.0
    %866 = vmatpush1.msra.mxu0 0.0
    %867 = vmatprep.subr.mxu0 0.0
    %868 = vmatpush1.msra.mxu0 0.0
    %869 = vmatprep.subr.mxu0 0.0
    %870 = vmatpush1.msra.mxu0 0.0
    %871 = vmatprep.subr.mxu0 0.0
    %872 = vmatpush1.msra.mxu0 0.0
    %873 = vmatprep.subr.mxu0 0.0
    %874 = vmatpush1.msra.mxu0 0.0
    %875 = vmatprep.subr.mxu0 0.0
    %876 = vmatpush1.msra.mxu0 0.0
    %877 = vmatprep.subr.mxu0 0.0
    %878 = vmatpush1.msra.mxu0 0.0
    %879 = vmatprep.mubr.f32.mxu0 0.0
    %880 = vmatmul.mubr.f32.gmra.mrb[0].mxu0 %v743
    %v881 = vpop.f32.mrb[0].mxu0
    %v882 = vadd.f32 0.0, %v881
    %v883 = vpop.f32.mrb[0].mxu0
    %v884 = vadd.f32 0.0, %v883
    %885 = vdwg.mxu0
    %v886 = vadd.f32 %v258, %v811
    %v887 = vadd.f32 %v260, %v813
    %v888 = vadd.f32 %v371, %v882
    %v889 = vadd.f32 %v373, %v884
    %v890 = vxor.u32 %v886, 2147483648
    %v891 = vmul.f32 %v890, 1.442695
    %v892 = vpow.pop %v891
    %v893 = vadd.f32 %v892, 1.0
    %v894 = vrcp.pop %v893
    %v895 = vmul.f32 1.0, %v894
    %v896 = vxor.u32 %v887, 2147483648
    %v897 = vmul.f32 %v896, 1.442695
    %v898 = vpow.pop %v897
    %v899 = vadd.f32 %v898, 1.0
    %v900 = vrcp.pop %v899
    %v901 = vmul.f32 1.0, %v900
    %v902 = vtanh.pop %v888
    %v903 = vxor.u32 %v889, 2147483648
    %v904 = vmul.f32 %v903, 1.442695
    %v905 = vpow.pop %v904
    %v906 = vadd.f32 %v905, 1.0
    %v907 = vrcp.pop %v906
    %v908 = vmul.f32 1.0, %v907
    %v909 = vmul.f32 %v901, %v741
    %v910 = vmul.f32 %v895, %v902
    %v911 = vadd.f32 %v909, %v910
    %v912 = vtanh.pop %v911
    %v913 = vmul.f32 %v908, %v912
    %914 = vmatprep.subr.mxu0 %v61
    %915 = vmatpush1.msra.mxu0 %v60
    %916 = vmatprep.subr.mxu0 %v65
    %917 = vmatpush1.msra.mxu0 %v64
    %918 = vmatprep.subr.mxu0 %v69
    %919 = vmatpush1.msra.mxu0 %v68
    %920 = vmatprep.subr.mxu0 %v73
    %921 = vmatpush1.msra.mxu0 %v72
    %922 = vmatprep.subr.mxu0 %v77
    %923 = vmatpush1.msra.mxu0 %v76
    %924 = vmatprep.subr.mxu0 %v81
    %925 = vmatpush1.msra.mxu0 %v80
    %926 = vmatprep.subr.mxu0 %v85
    %927 = vmatpush1.msra.mxu0 %v84
    %928 = vmatprep.subr.mxu0 %v89
    %929 = vmatpush1.msra.mxu0 %v88
    %930 = vmatprep.subr.mxu0 %v93
    %931 = vmatpush1.msra.mxu0 %v92
    %932 = vmatprep.subr.mxu0 %v97
    %933 = vmatpush1.msra.mxu0 %v96
    %934 = vmatprep.subr.mxu0 %v101
    %935 = vmatpush1.msra.mxu0 %v100
    %936 = vmatprep.subr.mxu0 %v105
    %937 = vmatpush1.msra.mxu0 %v104
    %938 = vmatprep.subr.mxu0 %v109
    %939 = vmatpush1.msra.mxu0 %v108
    %940 = vmatprep.subr.mxu0 %v113
    %941 = vmatpush1.msra.mxu0 %v112
    %942 = vmatprep.subr.mxu0 %v117
    %943 = vmatpush1.msra.mxu0 %v116
    %944 = vmatprep.subr.mxu0 %v121
    %945 = vmatpush1.msra.mxu0 %v120
    %946 = vmatprep.subr.mxu0 0.0
    %947 = vmatpush1.msra.mxu0 0.0
    %948 = vmatprep.subr.mxu0 0.0
    %949 = vmatpush1.msra.mxu0 0.0
    %950 = vmatprep.subr.mxu0 0.0
    %951 = vmatpush1.msra.mxu0 0.0
    %952 = vmatprep.subr.mxu0 0.0
    %953 = vmatpush1.msra.mxu0 0.0
    %954 = vmatprep.subr.mxu0 0.0
    %955 = vmatpush1.msra.mxu0 0.0
    %956 = vmatprep.subr.mxu0 0.0
    %957 = vmatpush1.msra.mxu0 0.0
    %958 = vmatprep.subr.mxu0 0.0
    %959 = vmatpush1.msra.mxu0 0.0
    %960 = vmatprep.subr.mxu0 0.0
    %961 = vmatpush1.msra.mxu0 0.0
    %962 = vmatprep.subr.mxu0 0.0
    %963 = vmatpush1.msra.mxu0 0.0
    %964 = vmatprep.subr.mxu0 0.0
    %965 = vmatpush1.msra.mxu0 0.0
    %966 = vmatprep.subr.mxu0 0.0
    %967 = vmatpush1.msra.mxu0 0.0
    %968 = vmatprep.subr.mxu0 0.0
    %969 = vmatpush1.msra.mxu0 0.0
    %970 = vmatprep.subr.mxu0 0.0
    %971 = vmatpush1.msra.mxu0 0.0
    %972 = vmatprep.subr.mxu0 0.0
    %973 = vmatpush1.msra.mxu0 0.0
    %974 = vmatprep.subr.mxu0 0.0
    %975 = vmatpush1.msra.mxu0 0.0
    %976 = vmatprep.subr.mxu0 0.0
    %977 = vmatpush1.msra.mxu0 0.0
    %978 = vmatprep.mubr.f32.mxu0 0.0
    %979 = vmatmul.mubr.f32.gmra.mrb[0].mxu0 %v913
    %v980 = vpop.f32.mrb[0].mxu0
    %v981 = vadd.f32 0.0, %v980
    %v982 = vpop.f32.mrb[0].mxu0
    %v983 = vadd.f32 0.0, %v982
    %984 = vdwg.mxu0
    %985 = vmatprep.subr.mxu0 %v63
    %986 = vmatpush1.msra.mxu0 %v62
    %987 = vmatprep.subr.mxu0 %v67
    %988 = vmatpush1.msra.mxu0 %v66
    %989 = vmatprep.subr.mxu0 %v71
    %990 = vmatpush1.msra.mxu0 %v70
    %991 = vmatprep.subr.mxu0 %v75
    %992 = vmatpush1.msra.mxu0 %v74
    %993 = vmatprep.subr.mxu0 %v79
    %994 = vmatpush1.msra.mxu0 %v78
    %995 = vmatprep.subr.mxu0 %v83
    %996 = vmatpush1.msra.mxu0 %v82
    %997 = vmatprep.subr.mxu0 %v87
    %998 = vmatpush1.msra.mxu0 %v86
    %999 = vmatprep.subr.mxu0 %v91
    %1000 = vmatpush1.msra.mxu0 %v90
    %1001 = vmatprep.subr.mxu0 %v95
    %1002 = vmatpush1.msra.mxu0 %v94
    %1003 = vmatprep.subr.mxu0 %v99
    %1004 = vmatpush1.msra.mxu0 %v98
    %1005 = vmatprep.subr.mxu0 %v103
    %1006 = vmatpush1.msra.mxu0 %v102
    %1007 = vmatprep.subr.mxu0 %v107
    %1008 = vmatpush1.msra.mxu0 %v106
    %1009 = vmatprep.subr.mxu0 %v111
    %1010 = vmatpush1.msra.mxu0 %v110
    %1011 = vmatprep.subr.mxu0 %v115
    %1012 = vmatpush1.msra.mxu0 %v114
    %1013 = vmatprep.subr.mxu0 %v119
    %1014 = vmatpush1.msra.mxu0 %v118
    %1015 = vmatprep.subr.mxu0 %v123
    %1016 = vmatpush1.msra.mxu0 %v122
    %1017 = vmatprep.subr.mxu0 0.0
    %1018 = vmatpush1.msra.mxu0 0.0
    %1019 = vmatprep.subr.mxu0 0.0
    %1020 = vmatpush1.msra.mxu0 0.0
    %1021 = vmatprep.subr.mxu0 0.0
    %1022 = vmatpush1.msra.mxu0 0.0
    %1023 = vmatprep.subr.mxu0 0.0
    %1024 = vmatpush1.msra.mxu0 0.0
    %1025 = vmatprep.subr.mxu0 0.0
    %1026 = vmatpush1.msra.mxu0 0.0
    %1027 = vmatprep.subr.mxu0 0.0
    %1028 = vmatpush1.msra.mxu0 0.0
    %1029 = vmatprep.subr.mxu0 0.0
    %1030 = vmatpush1.msra.mxu0 0.0
    %1031 = vmatprep.subr.mxu0 0.0
    %1032 = vmatpush1.msra.mxu0 0.0
    %1033 = vmatprep.subr.mxu0 0.0
    %1034 = vmatpush1.msra.mxu0 0.0
    %1035 = vmatprep.subr.mxu0 0.0
    %1036 = vmatpush1.msra.mxu0 0.0
    %1037 = vmatprep.subr.mxu0 0.0
    %1038 = vmatpush1.msra.mxu0 0.0
    %1039 = vmatprep.subr.mxu0 0.0
    %1040 = vmatpush1.msra.mxu0 0.0
    %1041 = vmatprep.subr.mxu0 0.0
    %1042 = vmatpush1.msra.mxu0 0.0
    %1043 = vmatprep.subr.mxu0 0.0
    %1044 = vmatpush1.msra.mxu0 0.0
    %1045 = vmatprep.subr.mxu0 0.0
    %1046 = vmatpush1.msra.mxu0 0.0
    %1047 = vmatprep.subr.mxu0 0.0
    %1048 = vmatpush1.msra.mxu0 0.0
    %1049 = vmatprep.mubr.f32.mxu0 0.0
    %1050 = vmatmul.mubr.f32.gmra.mrb[0].mxu0 %v913
    %v1051 = vpop.f32.mrb[0].mxu0
    %v1052 = vadd.f32 0.0, %v1051
    %v1053 = vpop.f32.mrb[0].mxu0
    %v1054 = vadd.f32 0.0, %v1053
    %1055 = vdwg.mxu0
    %v1056 = vadd.f32 %v264, %v981
    %v1057 = vadd.f32 %v266, %v983
    %v1058 = vadd.f32 %v377, %v1052
    %v1059 = vadd.f32 %v379, %v1054
    %v1060 = vxor.u32 %v1056, 2147483648
    %v1061 = vmul.f32 %v1060, 1.442695
    %v1062 = vpow.pop %v1061
    %v1063 = vadd.f32 %v1062, 1.0
    %v1064 = vrcp.pop %v1063
    %v1065 = vmul.f32 1.0, %v1064
    %v1066 = vxor.u32 %v1057, 2147483648
    %v1067 = vmul.f32 %v1066, 1.442695
    %v1068 = vpow.pop %v1067
    %v1069 = vadd.f32 %v1068, 1.0
    %v1070 = vrcp.pop %v1069
    %v1071 = vmul.f32 1.0, %v1070
    %v1072 = vtanh.pop %v1058
    %v1073 = vxor.u32 %v1059, 2147483648
    %v1074 = vmul.f32 %v1073, 1.442695
    %v1075 = vpow.pop %v1074
    %v1076 = vadd.f32 %v1075, 1.0
    %v1077 = vrcp.pop %v1076
    %v1078 = vmul.f32 1.0, %v1077
    %v1079 = vmul.f32 %v1071, %v911
    %v1080 = vmul.f32 %v1065, %v1072
    %v1081 = vadd.f32 %v1079, %v1080
    %v1082 = vtanh.pop %v1081
    %v1083 = vmul.f32 %v1078, %v1082
    %1084 = vmatprep.subr.mxu0 %v61
    %1085 = vmatpush1.msra.mxu0 %v60
    %1086 = vmatprep.subr.mxu0 %v65
    %1087 = vmatpush1.msra.mxu0 %v64
    %1088 = vmatprep.subr.mxu0 %v69
    %1089 = vmatpush1.msra.mxu0 %v68
    %1090 = vmatprep.subr.mxu0 %v73
    %1091 = vmatpush1.msra.mxu0 %v72
    %1092 = vmatprep.subr.mxu0 %v77
    %1093 = vmatpush1.msra.mxu0 %v76
    %1094 = vmatprep.subr.mxu0 %v81
    %1095 = vmatpush1.msra.mxu0 %v80
    %1096 = vmatprep.subr.mxu0 %v85
    %1097 = vmatpush1.msra.mxu0 %v84
    %1098 = vmatprep.subr.mxu0 %v89
    %1099 = vmatpush1.msra.mxu0 %v88
    %1100 = vmatprep.subr.mxu0 %v93
    %1101 = vmatpush1.msra.mxu0 %v92
    %1102 = vmatprep.subr.mxu0 %v97
    %1103 = vmatpush1.msra.mxu0 %v96
    %1104 = vmatprep.subr.mxu0 %v101
    %1105 = vmatpush1.msra.mxu0 %v100
    %1106 = vmatprep.subr.mxu0 %v105
    %1107 = vmatpush1.msra.mxu0 %v104
    %1108 = vmatprep.subr.mxu0 %v109
    %1109 = vmatpush1.msra.mxu0 %v108
    %1110 = vmatprep.subr.mxu0 %v113
    %1111 = vmatpush1.msra.mxu0 %v112
    %1112 = vmatprep.subr.mxu0 %v117
    %1113 = vmatpush1.msra.mxu0 %v116
    %1114 = vmatprep.subr.mxu0 %v121
    %1115 = vmatpush1.msra.mxu0 %v120
    %1116 = vmatprep.subr.mxu0 0.0
    %1117 = vmatpush1.msra.mxu0 0.0
    %1118 = vmatprep.subr.mxu0 0.0
    %1119 = vmatpush1.msra.mxu0 0.0
    %1120 = vmatprep.subr.mxu0 0.0
    %1121 = vmatpush1.msra.mxu0 0.0
    %1122 = vmatprep.subr.mxu0 0.0
    %1123 = vmatpush1.msra.mxu0 0.0
    %1124 = vmatprep.subr.mxu0 0.0
    %1125 = vmatpush1.msra.mxu0 0.0
    %1126 = vmatprep.subr.mxu0 0.0
    %1127 = vmatpush1.msra.mxu0 0.0
    %1128 = vmatprep.subr.mxu0 0.0
    %1129 = vmatpush1.msra.mxu0 0.0
    %1130 = vmatprep.subr.mxu0 0.0
    %1131 = vmatpush1.msra.mxu0 0.0
    %1132 = vmatprep.subr.mxu0 0.0
    %1133 = vmatpush1.msra.mxu0 0.0
    %1134 = vmatprep.subr.mxu0 0.0
    %1135 = vmatpush1.msra.mxu0 0.0
    %1136 = vmatprep.subr.mxu0 0.0
    %1137 = vmatpush1.msra.mxu0 0.0
    %1138 = vmatprep.subr.mxu0 0.0
    %1139 = vmatpush1.msra.mxu0 0.0
    %1140 = vmatprep.subr.mxu0 0.0
    %1141 = vmatpush1.msra.mxu0 0.0
    %1142 = vmatprep.subr.mxu0 0.0
    %1143 = vmatpush1.msra.mxu0 0.0
    %1144 = vmatprep.subr.mxu0 0.0
    %1145 = vmatpush1.msra.mxu0 0.0
    %1146 = vmatprep.subr.mxu0 0.0
    %1147 = vmatpush1.msra.mxu0 0.0
    %1148 = vmatprep.mubr.f32.mxu0 0.0
    %1149 = vmatmul.mubr.f32.gmra.mrb[0].mxu0 %v1083
    %v1150 = vpop.f32.mrb[0].mxu0
    %v1151 = vadd.f32 0.0, %v1150
    %v1152 = vpop.f32.mrb[0].mxu0
    %v1153 = vadd.f32 0.0, %v1152
    %1154 = vdwg.mxu0
    %1155 = vmatprep.subr.mxu0 %v63
    %1156 = vmatpush1.msra.mxu0 %v62
    %1157 = vmatprep.subr.mxu0 %v67
    %1158 = vmatpush1.msra.mxu0 %v66
    %1159 = vmatprep.subr.mxu0 %v71
    %1160 = vmatpush1.msra.mxu0 %v70
    %1161 = vmatprep.subr.mxu0 %v75
    %1162 = vmatpush1.msra.mxu0 %v74
    %1163 = vmatprep.subr.mxu0 %v79
    %1164 = vmatpush1.msra.mxu0 %v78
    %1165 = vmatprep.subr.mxu0 %v83
    %1166 = vmatpush1.msra.mxu0 %v82
    %1167 = vmatprep.subr.mxu0 %v87
    %1168 = vmatpush1.msra.mxu0 %v86
    %1169 = vmatprep.subr.mxu0 %v91
    %1170 = vmatpush1.msra.mxu0 %v90
    %1171 = vmatprep.subr.mxu0 %v95
    %1172 = vmatpush1.msra.mxu0 %v94
    %1173 = vmatprep.subr.mxu0 %v99
    %1174 = vmatpush1.msra.mxu0 %v98
    %1175 = vmatprep.subr.mxu0 %v103
    %1176 = vmatpush1.msra.mxu0 %v102
    %1177 = vmatprep.subr.mxu0 %v107
    %1178 = vmatpush1.msra.mxu0 %v106
    %1179 = vmatprep.subr.mxu0 %v111
    %1180 = vmatpush1.msra.mxu0 %v110
    %1181 = vmatprep.subr.mxu0 %v115
    %1182 = vmatpush1.msra.mxu0 %v114
    %1183 = vmatprep.subr.mxu0 %v119
    %1184 = vmatpush1.msra.mxu0 %v118
    %1185 = vmatprep.subr.mxu0 %v123
    %1186 = vmatpush1.msra.mxu0 %v122
    %1187 = vmatprep.subr.mxu0 0.0
    %1188 = vmatpush1.msra.mxu0 0.0
    %1189 = vmatprep.subr.mxu0 0.0
    %1190 = vmatpush1.msra.mxu0 0.0
    %1191 = vmatprep.subr.mxu0 0.0
    %1192 = vmatpush1.msra.mxu0 0.0
    %1193 = vmatprep.subr.mxu0 0.0
    %1194 = vmatpush1.msra.mxu0 0.0
    %1195 = vmatprep.subr.mxu0 0.0
    %1196 = vmatpush1.msra.mxu0 0.0
    %1197 = vmatprep.subr.mxu0 0.0
    %1198 = vmatpush1.msra.mxu0 0.0
    %1199 = vmatprep.subr.mxu0 0.0
    %1200 = vmatpush1.msra.mxu0 0.0
    %1201 = vmatprep.subr.mxu0 0.0
    %1202 = vmatpush1.msra.mxu0 0.0
    %1203 = vmatprep.subr.mxu0 0.0
    %1204 = vmatpush1.msra.mxu0 0.0
    %1205 = vmatprep.subr.mxu0 0.0
    %1206 = vmatpush1.msra.mxu0 0.0
    %1207 = vmatprep.subr.mxu0 0.0
    %1208 = vmatpush1.msra.mxu0 0.0
    %1209 = vmatprep.subr.mxu0 0.0
    %1210 = vmatpush1.msra.mxu0 0.0
    %1211 = vmatprep.subr.mxu0 0.0
    %1212 = vmatpush1.msra.mxu0 0.0
    %1213 = vmatprep.subr.mxu0 0.0
    %1214 = vmatpush1.msra.mxu0 0.0
    %1215 = vmatprep.subr.mxu0 0.0
    %1216 = vmatpush1.msra.mxu0 0.0
    %1217 = vmatprep.subr.mxu0 0.0
    %1218 = vmatpush1.msra.mxu0 0.0
    %1219 = vmatprep.mubr.f32.mxu0 0.0
    %1220 = vmatmul.mubr.f32.gmra.mrb[0].mxu0 %v1083
    %v1221 = vpop.f32.mrb[0].mxu0
    %v1222 = vadd.f32 0.0, %v1221
    %v1223 = vpop.f32.mrb[0].mxu0
    %v1224 = vadd.f32 0.0, %v1223
    %1225 = vdwg.mxu0
    %v1226 = vadd.f32 %v270, %v1151
    %v1227 = vadd.f32 %v272, %v1153
    %v1228 = vadd.f32 %v383, %v1222
    %v1229 = vadd.f32 %v385, %v1224
    %v1230 = vxor.u32 %v1226, 2147483648
    %v1231 = vmul.f32 %v1230, 1.442695
    %v1232 = vpow.pop %v1231
    %v1233 = vadd.f32 %v1232, 1.0
    %v1234 = vrcp.pop %v1233
    %v1235 = vmul.f32 1.0, %v1234
    %v1236 = vxor.u32 %v1227, 2147483648
    %v1237 = vmul.f32 %v1236, 1.442695
    %v1238 = vpow.pop %v1237
    %v1239 = vadd.f32 %v1238, 1.0
    %v1240 = vrcp.pop %v1239
    %v1241 = vmul.f32 1.0, %v1240
    %v1242 = vtanh.pop %v1228
    %v1243 = vxor.u32 %v1229, 2147483648
    %v1244 = vmul.f32 %v1243, 1.442695
    %v1245 = vpow.pop %v1244
    %v1246 = vadd.f32 %v1245, 1.0
    %v1247 = vrcp.pop %v1246
    %v1248 = vmul.f32 1.0, %v1247
    %v1249 = vmul.f32 %v1241, %v1081
    %v1250 = vmul.f32 %v1235, %v1242
    %v1251 = vadd.f32 %v1249, %v1250
    %v1252 = vtanh.pop %v1251
    %v1253 = vmul.f32 %v1248, %v1252
    %1254 = vmatprep.subr.mxu0 %v61
    %1255 = vmatpush1.msra.mxu0 %v60
    %1256 = vmatprep.subr.mxu0 %v65
    %1257 = vmatpush1.msra.mxu0 %v64
    %1258 = vmatprep.subr.mxu0 %v69
    %1259 = vmatpush1.msra.mxu0 %v68
    %1260 = vmatprep.subr.mxu0 %v73
    %1261 = vmatpush1.msra.mxu0 %v72
    %1262 = vmatprep.subr.mxu0 %v77
    %1263 = vmatpush1.msra.mxu0 %v76
    %1264 = vmatprep.subr.mxu0 %v81
    %1265 = vmatpush1.msra.mxu0 %v80
    %1266 = vmatprep.subr.mxu0 %v85
    %1267 = vmatpush1.msra.mxu0 %v84
    %1268 = vmatprep.subr.mxu0 %v89
    %1269 = vmatpush1.msra.mxu0 %v88
    %1270 = vmatprep.subr.mxu0 %v93
    %1271 = vmatpush1.msra.mxu0 %v92
    %1272 = vmatprep.subr.mxu0 %v97
    %1273 = vmatpush1.msra.mxu0 %v96
    %1274 = vmatprep.subr.mxu0 %v101
    %1275 = vmatpush1.msra.mxu0 %v100
    %1276 = vmatprep.subr.mxu0 %v105
    %1277 = vmatpush1.msra.mxu0 %v104
    %1278 = vmatprep.subr.mxu0 %v109
    %1279 = vmatpush1.msra.mxu0 %v108
    %1280 = vmatprep.subr.mxu0 %v113
    %1281 = vmatpush1.msra.mxu0 %v112
    %1282 = vmatprep.subr.mxu0 %v117
    %1283 = vmatpush1.msra.mxu0 %v116
    %1284 = vmatprep.subr.mxu0 %v121
    %1285 = vmatpush1.msra.mxu0 %v120
    %1286 = vmatprep.subr.mxu0 0.0
    %1287 = vmatpush1.msra.mxu0 0.0
    %1288 = vmatprep.subr.mxu0 0.0
    %1289 = vmatpush1.msra.mxu0 0.0
    %1290 = vmatprep.subr.mxu0 0.0
    %1291 = vmatpush1.msra.mxu0 0.0
    %1292 = vmatprep.subr.mxu0 0.0
    %1293 = vmatpush1.msra.mxu0 0.0
    %1294 = vmatprep.subr.mxu0 0.0
    %1295 = vmatpush1.msra.mxu0 0.0
    %1296 = vmatprep.subr.mxu0 0.0
    %1297 = vmatpush1.msra.mxu0 0.0
    %1298 = vmatprep.subr.mxu0 0.0
    %1299 = vmatpush1.msra.mxu0 0.0
    %1300 = vmatprep.subr.mxu0 0.0
    %1301 = vmatpush1.msra.mxu0 0.0
    %1302 = vmatprep.subr.mxu0 0.0
    %1303 = vmatpush1.msra.mxu0 0.0
    %1304 = vmatprep.subr.mxu0 0.0
    %1305 = vmatpush1.msra.mxu0 0.0
    %1306 = vmatprep.subr.mxu0 0.0
    %1307 = vmatpush1.msra.mxu0 0.0
    %1308 = vmatprep.subr.mxu0 0.0
    %1309 = vmatpush1.msra.mxu0 0.0
    %1310 = vmatprep.subr.mxu0 0.0
    %1311 = vmatpush1.msra.mxu0 0.0
    %1312 = vmatprep.subr.mxu0 0.0
    %1313 = vmatpush1.msra.mxu0 0.0
    %1314 = vmatprep.subr.mxu0 0.0
    %1315 = vmatpush1.msra.mxu0 0.0
    %1316 = vmatprep.subr.mxu0 0.0
    %1317 = vmatpush1.msra.mxu0 0.0
    %1318 = vmatprep.mubr.f32.mxu0 0.0
    %1319 = vmatmul.mubr.f32.gmra.mrb[0].mxu0 %v1253
    %v1320 = vpop.f32.mrb[0].mxu0
    %v1321 = vadd.f32 0.0, %v1320
    %v1322 = vpop.f32.mrb[0].mxu0
    %v1323 = vadd.f32 0.0, %v1322
    %1324 = vdwg.mxu0
    %1325 = vmatprep.subr.mxu0 %v63
    %1326 = vmatpush1.msra.mxu0 %v62
    %1327 = vmatprep.subr.mxu0 %v67
    %1328 = vmatpush1.msra.mxu0 %v66
    %1329 = vmatprep.subr.mxu0 %v71
    %1330 = vmatpush1.msra.mxu0 %v70
    %1331 = vmatprep.subr.mxu0 %v75
    %1332 = vmatpush1.msra.mxu0 %v74
    %1333 = vmatprep.subr.mxu0 %v79
    %1334 = vmatpush1.msra.mxu0 %v78
    %1335 = vmatprep.subr.mxu0 %v83
    %1336 = vmatpush1.msra.mxu0 %v82
    %1337 = vmatprep.subr.mxu0 %v87
    %1338 = vmatpush1.msra.mxu0 %v86
    %1339 = vmatprep.subr.mxu0 %v91
    %1340 = vmatpush1.msra.mxu0 %v90
    %1341 = vmatprep.subr.mxu0 %v95
    %1342 = vmatpush1.msra.mxu0 %v94
    %1343 = vmatprep.subr.mxu0 %v99
    %1344 = vmatpush1.msra.mxu0 %v98
    %1345 = vmatprep.subr.mxu0 %v103
    %1346 = vmatpush1.msra.mxu0 %v102
    %1347 = vmatprep.subr.mxu0 %v107
    %1348 = vmatpush1.msra.mxu0 %v106
    %1349 = vmatprep.subr.mxu0 %v111
    %1350 = vmatpush1.msra.mxu0 %v110
    %1351 = vmatprep.subr.mxu0 %v115
    %1352 = vmatpush1.msra.mxu0 %v114
    %1353 = vmatprep.subr.mxu0 %v119
    %1354 = vmatpush1.msra.mxu0 %v118
    %1355 = vmatprep.subr.mxu0 %v123
    %1356 = vmatpush1.msra.mxu0 %v122
    %1357 = vmatprep.subr.mxu0 0.0
    %1358 = vmatpush1.msra.mxu0 0.0
    %1359 = vmatprep.subr.mxu0 0.0
    %1360 = vmatpush1.msra.mxu0 0.0
    %1361 = vmatprep.subr.mxu0 0.0
    %1362 = vmatpush1.msra.mxu0 0.0
    %1363 = vmatprep.subr.mxu0 0.0
    %1364 = vmatpush1.msra.mxu0 0.0
    %1365 = vmatprep.subr.mxu0 0.0
    %1366 = vmatpush1.msra.mxu0 0.0
    %1367 = vmatprep.subr.mxu0 0.0
    %1368 = vmatpush1.msra.mxu0 0.0
    %1369 = vmatprep.subr.mxu0 0.0
    %1370 = vmatpush1.msra.mxu0 0.0
    %1371 = vmatprep.subr.mxu0 0.0
    %1372 = vmatpush1.msra.mxu0 0.0
    %1373 = vmatprep.subr.mxu0 0.0
    %1374 = vmatpush1.msra.mxu0 0.0
    %1375 = vmatprep.subr.mxu0 0.0
    %1376 = vmatpush1.msra.mxu0 0.0
    %1377 = vmatprep.subr.mxu0 0.0
    %1378 = vmatpush1.msra.mxu0 0.0
    %1379 = vmatprep.subr.mxu0 0.0
    %1380 = vmatpush1.msra.mxu0 0.0
    %1381 = vmatprep.subr.mxu0 0.0
    %1382 = vmatpush1.msra.mxu0 0.0
    %1383 = vmatprep.subr.mxu0 0.0
    %1384 = vmatpush1.msra.mxu0 0.0
    %1385 = vmatprep.subr.mxu0 0.0
    %1386 = vmatpush1.msra.mxu0 0.0
    %1387 = vmatprep.subr.mxu0 0.0
    %1388 = vmatpush1.msra.mxu0 0.0
    %1389 = vmatprep.mubr.f32.mxu0 0.0
    %1390 = vmatmul.mubr.f32.gmra.mrb[0].mxu0 %v1253
    %v1391 = vpop.f32.mrb[0].mxu0
    %v1392 = vadd.f32 0.0, %v1391
    %v1393 = vpop.f32.mrb[0].mxu0
    %v1394 = vadd.f32 0.0, %v1393
    %1395 = vdwg.mxu0
    %v1396 = vadd.f32 %v276, %v1321
    %v1397 = vadd.f32 %v278, %v1323
    %v1398 = vadd.f32 %v389, %v1392
    %v1399 = vadd.f32 %v391, %v1394
    %v1400 = vxor.u32 %v1396, 2147483648
    %v1401 = vmul.f32 %v1400, 1.442695
    %v1402 = vpow.pop %v1401
    %v1403 = vadd.f32 %v1402, 1.0
    %v1404 = vrcp.pop %v1403
    %v1405 = vmul.f32 1.0, %v1404
    %v1406 = vxor.u32 %v1397, 2147483648
    %v1407 = vmul.f32 %v1406, 1.442695
    %v1408 = vpow.pop %v1407
    %v1409 = vadd.f32 %v1408, 1.0
    %v1410 = vrcp.pop %v1409
    %v1411 = vmul.f32 1.0, %v1410
    %v1412 = vtanh.pop %v1398
    %v1413 = vxor.u32 %v1399, 2147483648
    %v1414 = vmul.f32 %v1413, 1.442695
    %v1415 = vpow.pop %v1414
    %v1416 = vadd.f32 %v1415, 1.0
    %v1417 = vrcp.pop %v1416
    %v1418 = vmul.f32 1.0, %v1417
    %v1419 = vmul.f32 %v1411, %v1251
    %v1420 = vmul.f32 %v1405, %v1412
    %v1421 = vadd.f32 %v1419, %v1420
    %v1422 = vtanh.pop %v1421
    %v1423 = vmul.f32 %v1418, %v1422
    %1424 = vmatprep.subr.mxu0 %v61
    %1425 = vmatpush1.msra.mxu0 %v60
    %1426 = vmatprep.subr.mxu0 %v65
    %1427 = vmatpush1.msra.mxu0 %v64
    %1428 = vmatprep.subr.mxu0 %v69
    %1429 = vmatpush1.msra.mxu0 %v68
    %1430 = vmatprep.subr.mxu0 %v73
    %1431 = vmatpush1.msra.mxu0 %v72
    %1432 = vmatprep.subr.mxu0 %v77
    %1433 = vmatpush1.msra.mxu0 %v76
    %1434 = vmatprep.subr.mxu0 %v81
    %1435 = vmatpush1.msra.mxu0 %v80
    %1436 = vmatprep.subr.mxu0 %v85
    %1437 = vmatpush1.msra.mxu0 %v84
    %1438 = vmatprep.subr.mxu0 %v89
    %1439 = vmatpush1.msra.mxu0 %v88
    %1440 = vmatprep.subr.mxu0 %v93
    %1441 = vmatpush1.msra.mxu0 %v92
    %1442 = vmatprep.subr.mxu0 %v97
    %1443 = vmatpush1.msra.mxu0 %v96
    %1444 = vmatprep.subr.mxu0 %v101
    %1445 = vmatpush1.msra.mxu0 %v100
    %1446 = vmatprep.subr.mxu0 %v105
    %1447 = vmatpush1.msra.mxu0 %v104
    %1448 = vmatprep.subr.mxu0 %v109
    %1449 = vmatpush1.msra.mxu0 %v108
    %1450 = vmatprep.subr.mxu0 %v113
    %1451 = vmatpush1.msra.mxu0 %v112
    %1452 = vmatprep.subr.mxu0 %v117
    %1453 = vmatpush1.msra.mxu0 %v116
    %1454 = vmatprep.subr.mxu0 %v121
    %1455 = vmatpush1.msra.mxu0 %v120
    %1456 = vmatprep.subr.mxu0 0.0
    %1457 = vmatpush1.msra.mxu0 0.0
    %1458 = vmatprep.subr.mxu0 0.0
    %1459 = vmatpush1.msra.mxu0 0.0
    %1460 = vmatprep.subr.mxu0 0.0
    %1461 = vmatpush1.msra.mxu0 0.0
    %1462 = vmatprep.subr.mxu0 0.0
    %1463 = vmatpush1.msra.mxu0 0.0
    %1464 = vmatprep.subr.mxu0 0.0
    %1465 = vmatpush1.msra.mxu0 0.0
    %1466 = vmatprep.subr.mxu0 0.0
    %1467 = vmatpush1.msra.mxu0 0.0
    %1468 = vmatprep.subr.mxu0 0.0
    %1469 = vmatpush1.msra.mxu0 0.0
    %1470 = vmatprep.subr.mxu0 0.0
    %1471 = vmatpush1.msra.mxu0 0.0
    %1472 = vmatprep.subr.mxu0 0.0
    %1473 = vmatpush1.msra.mxu0 0.0
    %1474 = vmatprep.subr.mxu0 0.0
    %1475 = vmatpush1.msra.mxu0 0.0
    %1476 = vmatprep.subr.mxu0 0.0
    %1477 = vmatpush1.msra.mxu0 0.0
    %1478 = vmatprep.subr.mxu0 0.0
    %1479 = vmatpush1.msra.mxu0 0.0
    %1480 = vmatprep.subr.mxu0 0.0
    %1481 = vmatpush1.msra.mxu0 0.0
    %1482 = vmatprep.subr.mxu0 0.0
    %1483 = vmatpush1.msra.mxu0 0.0
    %1484 = vmatprep.subr.mxu0 0.0
    %1485 = vmatpush1.msra.mxu0 0.0
    %1486 = vmatprep.subr.mxu0 0.0
    %1487 = vmatpush1.msra.mxu0 0.0
    %1488 = vmatprep.mubr.f32.mxu0 0.0
    %1489 = vmatmul.mubr.f32.gmra.mrb[0].mxu0 %v1423
    %v1490 = vpop.f32.mrb[0].mxu0
    %v1491 = vadd.f32 0.0, %v1490
    %v1492 = vpop.f32.mrb[0].mxu0
    %v1493 = vadd.f32 0.0, %v1492
    %1494 = vdwg.mxu0
    %1495 = vmatprep.subr.mxu0 %v63
    %1496 = vmatpush1.msra.mxu0 %v62
    %1497 = vmatprep.subr.mxu0 %v67
    %1498 = vmatpush1.msra.mxu0 %v66
    %1499 = vmatprep.subr.mxu0 %v71
    %1500 = vmatpush1.msra.mxu0 %v70
    %1501 = vmatprep.subr.mxu0 %v75
    %1502 = vmatpush1.msra.mxu0 %v74
    %1503 = vmatprep.subr.mxu0 %v79
    %1504 = vmatpush1.msra.mxu0 %v78
    %1505 = vmatprep.subr.mxu0 %v83
    %1506 = vmatpush1.msra.mxu0 %v82
    %1507 = vmatprep.subr.mxu0 %v87
    %1508 = vmatpush1.msra.mxu0 %v86
    %1509 = vmatprep.subr.mxu0 %v91
    %1510 = vmatpush1.msra.mxu0 %v90
    %1511 = vmatprep.subr.mxu0 %v95
    %1512 = vmatpush1.msra.mxu0 %v94
    %1513 = vmatprep.subr.mxu0 %v99
    %1514 = vmatpush1.msra.mxu0 %v98
    %1515 = vmatprep.subr.mxu0 %v103
    %1516 = vmatpush1.msra.mxu0 %v102
    %1517 = vmatprep.subr.mxu0 %v107
    %1518 = vmatpush1.msra.mxu0 %v106
    %1519 = vmatprep.subr.mxu0 %v111
    %1520 = vmatpush1.msra.mxu0 %v110
    %1521 = vmatprep.subr.mxu0 %v115
    %1522 = vmatpush1.msra.mxu0 %v114
    %1523 = vmatprep.subr.mxu0 %v119
    %1524 = vmatpush1.msra.mxu0 %v118
    %1525 = vmatprep.subr.mxu0 %v123
    %1526 = vmatpush1.msra.mxu0 %v122
    %1527 = vmatprep.subr.mxu0 0.0
    %1528 = vmatpush1.msra.mxu0 0.0
    %1529 = vmatprep.subr.mxu0 0.0
    %1530 = vmatpush1.msra.mxu0 0.0
    %1531 = vmatprep.subr.mxu0 0.0
    %1532 = vmatpush1.msra.mxu0 0.0
    %1533 = vmatprep.subr.mxu0 0.0
    %1534 = vmatpush1.msra.mxu0 0.0
    %1535 = vmatprep.subr.mxu0 0.0
    %1536 = vmatpush1.msra.mxu0 0.0
    %1537 = vmatprep.subr.mxu0 0.0
    %1538 = vmatpush1.msra.mxu0 0.0
    %1539 = vmatprep.subr.mxu0 0.0
    %1540 = vmatpush1.msra.mxu0 0.0
    %1541 = vmatprep.subr.mxu0 0.0
    %1542 = vmatpush1.msra.mxu0 0.0
    %1543 = vmatprep.subr.mxu0 0.0
    %1544 = vmatpush1.msra.mxu0 0.0
    %1545 = vmatprep.subr.mxu0 0.0
    %1546 = vmatpush1.msra.mxu0 0.0
    %1547 = vmatprep.subr.mxu0 0.0
    %1548 = vmatpush1.msra.mxu0 0.0
    %1549 = vmatprep.subr.mxu0 0.0
    %1550 = vmatpush1.msra.mxu0 0.0
    %1551 = vmatprep.subr.mxu0 0.0
    %1552 = vmatpush1.msra.mxu0 0.0
    %1553 = vmatprep.subr.mxu0 0.0
    %1554 = vmatpush1.msra.mxu0 0.0
    %1555 = vmatprep.subr.mxu0 0.0
    %1556 = vmatpush1.msra.mxu0 0.0
    %1557 = vmatprep.subr.mxu0 0.0
    %1558 = vmatpush1.msra.mxu0 0.0
    %1559 = vmatprep.mubr.f32.mxu0 0.0
    %1560 = vmatmul.mubr.f32.gmra.mrb[0].mxu0 %v1423
    %v1561 = vpop.f32.mrb[0].mxu0
    %v1562 = vadd.f32 0.0, %v1561
    %v1563 = vpop.f32.mrb[0].mxu0
    %v1564 = vadd.f32 0.0, %v1563
    %1565 = vdwg.mxu0
    %v1566 = vadd.f32 %v282, %v1491
    %v1567 = vadd.f32 %v284, %v1493
    %v1568 = vadd.f32 %v395, %v1562
    %v1569 = vadd.f32 %v397, %v1564
    %v1570 = vxor.u32 %v1566, 2147483648
    %v1571 = vmul.f32 %v1570, 1.442695
    %v1572 = vpow.pop %v1571
    %v1573 = vadd.f32 %v1572, 1.0
    %v1574 = vrcp.pop %v1573
    %v1575 = vmul.f32 1.0, %v1574
    %v1576 = vxor.u32 %v1567, 2147483648
    %v1577 = vmul.f32 %v1576, 1.442695
    %v1578 = vpow.pop %v1577
    %v1579 = vadd.f32 %v1578, 1.0
    %v1580 = vrcp.pop %v1579
    %v1581 = vmul.f32 1.0, %v1580
    %v1582 = vtanh.pop %v1568
    %v1583 = vxor.u32 %v1569, 2147483648
    %v1584 = vmul.f32 %v1583, 1.442695
    %v1585 = vpow.pop %v1584
    %v1586 = vadd.f32 %v1585, 1.0
    %v1587 = vrcp.pop %v1586
    %v1588 = vmul.f32 1.0, %v1587
    %v1589 = vmul.f32 %v1581, %v1421
    %v1590 = vmul.f32 %v1575, %v1582
    %v1591 = vadd.f32 %v1589, %v1590
    %v1592 = vtanh.pop %v1591
    %v1593 = vmul.f32 %v1588, %v1592
    %1594 = vmatprep.subr.mxu0 %v61
    %1595 = vmatpush1.msra.mxu0 %v60
    %1596 = vmatprep.subr.mxu0 %v65
    %1597 = vmatpush1.msra.mxu0 %v64
    %1598 = vmatprep.subr.mxu0 %v69
    %1599 = vmatpush1.msra.mxu0 %v68
    %1600 = vmatprep.subr.mxu0 %v73
    %1601 = vmatpush1.msra.mxu0 %v72
    %1602 = vmatprep.subr.mxu0 %v77
    %1603 = vmatpush1.msra.mxu0 %v76
    %1604 = vmatprep.subr.mxu0 %v81
    %1605 = vmatpush1.msra.mxu0 %v80
    %1606 = vmatprep.subr.mxu0 %v85
    %1607 = vmatpush1.msra.mxu0 %v84
    %1608 = vmatprep.subr.mxu0 %v89
    %1609 = vmatpush1.msra.mxu0 %v88
    %1610 = vmatprep.subr.mxu0 %v93
    %1611 = vmatpush1.msra.mxu0 %v92
    %1612 = vmatprep.subr.mxu0 %v97
    %1613 = vmatpush1.msra.mxu0 %v96
    %1614 = vmatprep.subr.mxu0 %v101
    %1615 = vmatpush1.msra.mxu0 %v100
    %1616 = vmatprep.subr.mxu0 %v105
    %1617 = vmatpush1.msra.mxu0 %v104
    %1618 = vmatprep.subr.mxu0 %v109
    %1619 = vmatpush1.msra.mxu0 %v108
    %1620 = vmatprep.subr.mxu0 %v113
    %1621 = vmatpush1.msra.mxu0 %v112
    %1622 = vmatprep.subr.mxu0 %v117
    %1623 = vmatpush1.msra.mxu0 %v116
    %1624 = vmatprep.subr.mxu0 %v121
    %1625 = vmatpush1.msra.mxu0 %v120
    %1626 = vmatprep.subr.mxu0 0.0
    %1627 = vmatpush1.msra.mxu0 0.0
    %1628 = vmatprep.subr.mxu0 0.0
    %1629 = vmatpush1.msra.mxu0 0.0
    %1630 = vmatprep.subr.mxu0 0.0
    %1631 = vmatpush1.msra.mxu0 0.0
    %1632 = vmatprep.subr.mxu0 0.0
    %1633 = vmatpush1.msra.mxu0 0.0
    %1634 = vmatprep.subr.mxu0 0.0
    %1635 = vmatpush1.msra.mxu0 0.0
    %1636 = vmatprep.subr.mxu0 0.0
    %1637 = vmatpush1.msra.mxu0 0.0
    %1638 = vmatprep.subr.mxu0 0.0
    %1639 = vmatpush1.msra.mxu0 0.0
    %1640 = vmatprep.subr.mxu0 0.0
    %1641 = vmatpush1.msra.mxu0 0.0
    %1642 = vmatprep.subr.mxu0 0.0
    %1643 = vmatpush1.msra.mxu0 0.0
    %1644 = vmatprep.subr.mxu0 0.0
    %1645 = vmatpush1.msra.mxu0 0.0
    %1646 = vmatprep.subr.mxu0 0.0
    %1647 = vmatpush1.msra.mxu0 0.0
    %1648 = vmatprep.subr.mxu0 0.0
    %1649 = vmatpush1.msra.mxu0 0.0
    %1650 = vmatprep.subr.mxu0 0.0
    %1651 = vmatpush1.msra.mxu0 0.0
    %1652 = vmatprep.subr.mxu0 0.0
    %1653 = vmatpush1.msra.mxu0 0.0
    %1654 = vmatprep.subr.mxu0 0.0
    %1655 = vmatpush1.msra.mxu0 0.0
    %1656 = vmatprep.subr.mxu0 0.0
    %1657 = vmatpush1.msra.mxu0 0.0
    %1658 = vmatprep.mubr.f32.mxu0 0.0
    %1659 = vmatmul.mubr.f32.gmra.mrb[0].mxu0 %v1593
    %v1660 = vpop.f32.mrb[0].mxu0
    %v1661 = vadd.f32 0.0, %v1660
    %v1662 = vpop.f32.mrb[0].mxu0
    %v1663 = vadd.f32 0.0, %v1662
    %1664 = vdwg.mxu0
    %1665 = vmatprep.subr.mxu0 %v63
    %1666 = vmatpush1.msra.mxu0 %v62
    %1667 = vmatprep.subr.mxu0 %v67
    %1668 = vmatpush1.msra.mxu0 %v66
    %1669 = vmatprep.subr.mxu0 %v71
    %1670 = vmatpush1.msra.mxu0 %v70
    %1671 = vmatprep.subr.mxu0 %v75
    %1672 = vmatpush1.msra.mxu0 %v74
    %1673 = vmatprep.subr.mxu0 %v79
    %1674 = vmatpush1.msra.mxu0 %v78
    %1675 = vmatprep.subr.mxu0 %v83
    %1676 = vmatpush1.msra.mxu0 %v82
    %1677 = vmatprep.subr.mxu0 %v87
    %1678 = vmatpush1.msra.mxu0 %v86
    %1679 = vmatprep.subr.mxu0 %v91
    %1680 = vmatpush1.msra.mxu0 %v90
    %1681 = vmatprep.subr.mxu0 %v95
    %1682 = vmatpush1.msra.mxu0 %v94
    %1683 = vmatprep.subr.mxu0 %v99
    %1684 = vmatpush1.msra.mxu0 %v98
    %1685 = vmatprep.subr.mxu0 %v103
    %1686 = vmatpush1.msra.mxu0 %v102
    %1687 = vmatprep.subr.mxu0 %v107
    %1688 = vmatpush1.msra.mxu0 %v106
    %1689 = vmatprep.subr.mxu0 %v111
    %1690 = vmatpush1.msra.mxu0 %v110
    %1691 = vmatprep.subr.mxu0 %v115
    %1692 = vmatpush1.msra.mxu0 %v114
    %1693 = vmatprep.subr.mxu0 %v119
    %1694 = vmatpush1.msra.mxu0 %v118
    %1695 = vmatprep.subr.mxu0 %v123
    %1696 = vmatpush1.msra.mxu0 %v122
    %1697 = vmatprep.subr.mxu0 0.0
    %1698 = vmatpush1.msra.mxu0 0.0
    %1699 = vmatprep.subr.mxu0 0.0
    %1700 = vmatpush1.msra.mxu0 0.0
    %1701 = vmatprep.subr.mxu0 0.0
    %1702 = vmatpush1.msra.mxu0 0.0
    %1703 = vmatprep.subr.mxu0 0.0
    %1704 = vmatpush1.msra.mxu0 0.0
    %1705 = vmatprep.subr.mxu0 0.0
    %1706 = vmatpush1.msra.mxu0 0.0
    %1707 = vmatprep.subr.mxu0 0.0
    %1708 = vmatpush1.msra.mxu0 0.0
    %1709 = vmatprep.subr.mxu0 0.0
    %1710 = vmatpush1.msra.mxu0 0.0
    %1711 = vmatprep.subr.mxu0 0.0
    %1712 = vmatpush1.msra.mxu0 0.0
    %1713 = vmatprep.subr.mxu0 0.0
    %1714 = vmatpush1.msra.mxu0 0.0
    %1715 = vmatprep.subr.mxu0 0.0
    %1716 = vmatpush1.msra.mxu0 0.0
    %1717 = vmatprep.subr.mxu0 0.0
    %1718 = vmatpush1.msra.mxu0 0.0
    %1719 = vmatprep.subr.mxu0 0.0
    %1720 = vmatpush1.msra.mxu0 0.0
    %1721 = vmatprep.subr.mxu0 0.0
    %1722 = vmatpush1.msra.mxu0 0.0
    %1723 = vmatprep.subr.mxu0 0.0
    %1724 = vmatpush1.msra.mxu0 0.0
    %1725 = vmatprep.subr.mxu0 0.0
    %1726 = vmatpush1.msra.mxu0 0.0
    %1727 = vmatprep.subr.mxu0 0.0
    %1728 = vmatpush1.msra.mxu0 0.0
    %1729 = vmatprep.mubr.f32.mxu0 0.0
    %1730 = vmatmul.mubr.f32.gmra.mrb[0].mxu0 %v1593
    %v1731 = vpop.f32.mrb[0].mxu0
    %v1732 = vadd.f32 0.0, %v1731
    %v1733 = vpop.f32.mrb[0].mxu0
    %1734 = vdwg.mxu0
    %v1735 = vadd.f32 %v288, %v1661
    %v1736 = vadd.f32 %v290, %v1663
    %v1737 = vadd.f32 %v401, %v1732
    %v1738 = vxor.u32 %v1735, 2147483648
    %v1739 = vmul.f32 %v1738, 1.442695
    %v1740 = vpow.pop %v1739
    %v1741 = vadd.f32 %v1740, 1.0
    %v1742 = vrcp.pop %v1741
    %v1743 = vmul.f32 1.0, %v1742
    %v1744 = vxor.u32 %v1736, 2147483648
    %v1745 = vmul.f32 %v1744, 1.442695
    %v1746 = vpow.pop %v1745
    %v1747 = vadd.f32 %v1746, 1.0
    %v1748 = vrcp.pop %v1747
    %v1749 = vmul.f32 1.0, %v1748
    %v1750 = vtanh.pop %v1737
    %v1751 = vmul.f32 %v1749, %v1591
    %v1752 = vmul.f32 %v1743, %v1750
    %v1753 = vadd.f32 %v1751, %v1752
    %v1754 = vld [vmem:[#allocation5] sm:$0xff]
    %v1755 = vld [vmem:[#allocation5 + $0x8] sm:$0xff]
    %v1756 = vld [vmem:[#allocation5 + $0x10] sm:$0xff]
    %v1757 = vld [vmem:[#allocation5 + $0x18] sm:$0xff]
    %v1758 = vld [vmem:[#allocation5 + $0x20] sm:$0xff]
    %v1759 = vld [vmem:[#allocation5 + $0x28] sm:$0xff]
    %v1760 = vld [vmem:[#allocation5 + $0x30] sm:$0xff]
    %v1761 = vld [vmem:[#allocation5 + $0x38] sm:$0xff]
    %v1762 = vld [vmem:[#allocation5 + $0x40] sm:$0xff]
    %v1763 = vld [vmem:[#allocation5 + $0x48] sm:$0xff]
    %v1764 = vld [vmem:[#allocation5 + $0x50] sm:$0xff]
    %v1765 = vld [vmem:[#allocation5 + $0x58] sm:$0xff]
    %v1766 = vld [vmem:[#allocation5 + $0x60] sm:$0xff]
    %v1767 = vld [vmem:[#allocation5 + $0x68] sm:$0xff]
    %v1768 = vld [vmem:[#allocation5 + $0x70] sm:$0xff]
    %v1769 = vld [vmem:[#allocation5 + $0x78] sm:$0xff]
    %v1770 = vld [vmem:[%s5] sm:$0x1]
    %v1772 = vlaneseq
    %v1773 = vshrl.u32 %v1772, 7
    %v1774 = vsub.s32 0, %v1773
    %v1775 = vrot.slane %v1770, %v1774
    %1777 = vmatprep.subr.mxu0 0.0
    %1778 = vmatpush1.msra.mxu0 %v1754
    %1779 = vmatprep.subr.mxu0 0.0
    %1780 = vmatpush1.msra.mxu0 %v1755
    %1781 = vmatprep.subr.mxu0 0.0
    %1782 = vmatpush1.msra.mxu0 %v1756
    %1783 = vmatprep.subr.mxu0 0.0
    %1784 = vmatpush1.msra.mxu0 %v1757
    %1785 = vmatprep.subr.mxu0 0.0
    %1786 = vmatpush1.msra.mxu0 %v1758
    %1787 = vmatprep.subr.mxu0 0.0
    %1788 = vmatpush1.msra.mxu0 %v1759
    %1789 = vmatprep.subr.mxu0 0.0
    %1790 = vmatpush1.msra.mxu0 %v1760
    %1791 = vmatprep.subr.mxu0 0.0
    %1792 = vmatpush1.msra.mxu0 %v1761
    %1793 = vmatprep.subr.mxu0 0.0
    %1794 = vmatpush1.msra.mxu0 %v1762
    %1795 = vmatprep.subr.mxu0 0.0
    %1796 = vmatpush1.msra.mxu0 %v1763
    %1797 = vmatprep.subr.mxu0 0.0
    %1798 = vmatpush1.msra.mxu0 %v1764
    %1799 = vmatprep.subr.mxu0 0.0
    %1800 = vmatpush1.msra.mxu0 %v1765
    %1801 = vmatprep.subr.mxu0 0.0
    %1802 = vmatpush1.msra.mxu0 %v1766
    %1803 = vmatprep.subr.mxu0 0.0
    %1804 = vmatpush1.msra.mxu0 %v1767
    %1805 = vmatprep.subr.mxu0 0.0
    %1806 = vmatpush1.msra.mxu0 %v1768
    %1807 = vmatprep.subr.mxu0 0.0
    %1808 = vmatpush1.msra.mxu0 %v1769
    %1809 = vmatprep.subr.mxu0 0.0
    %1810 = vmatpush1.msra.mxu0 0.0
    %1811 = vmatprep.subr.mxu0 0.0
    %1812 = vmatpush1.msra.mxu0 0.0
    %1813 = vmatprep.subr.mxu0 0.0
    %1814 = vmatpush1.msra.mxu0 0.0
    %1815 = vmatprep.subr.mxu0 0.0
    %1816 = vmatpush1.msra.mxu0 0.0
    %1817 = vmatprep.subr.mxu0 0.0
    %1818 = vmatpush1.msra.mxu0 0.0
    %1819 = vmatprep.subr.mxu0 0.0
    %1820 = vmatpush1.msra.mxu0 0.0
    %1821 = vmatprep.subr.mxu0 0.0
    %1822 = vmatpush1.msra.mxu0 0.0
    %1823 = vmatprep.subr.mxu0 0.0
    %1824 = vmatpush1.msra.mxu0 0.0
    %1825 = vmatprep.subr.mxu0 0.0
    %1826 = vmatpush1.msra.mxu0 0.0
    %1827 = vmatprep.subr.mxu0 0.0
    %1828 = vmatpush1.msra.mxu0 0.0
    %1829 = vmatprep.subr.mxu0 0.0
    %1830 = vmatpush1.msra.mxu0 0.0
    %1831 = vmatprep.subr.mxu0 0.0
    %1832 = vmatpush1.msra.mxu0 0.0
    %1833 = vmatprep.subr.mxu0 0.0
    %1834 = vmatpush1.msra.mxu0 0.0
    %1835 = vmatprep.subr.mxu0 0.0
    %1836 = vmatpush1.msra.mxu0 0.0
    %1837 = vmatprep.subr.mxu0 0.0
    %1838 = vmatpush1.msra.mxu0 0.0
    %1839 = vmatprep.subr.mxu0 0.0
    %1840 = vmatpush1.msra.mxu0 0.0
    %1841 = vmatprep.mubr.f32.mxu0 0.0
    %1842 = vmatmul.mubr.f32.gmra.mrb[0].mxu0 %v1753
    %v1843 = vpop.f32.mrb[0].mxu0
    %v1844 = vadd.f32 %v1775, %v1843
    %v1845 = vpop.f32.mrb[0].mxu0
    %1846 = vdwg.mxu0
    %1847 = vmax.xlane.f32.xlu0 %v1844
    %v1848 = vpop.xlane.xlu0 %1847
    %v1849 = vsub.f32 %v1844, %v1848
    %v1850 = vmul.f32 %v1849, 1.442695
    %v1851 = vpow.pop %v1850
    %1852 = vadd.xlane.f32.xlu0 %v1851
    %v1853 = vpop.xlane.xlu0 %1852
    %v1854 = vrcp.pop %v1853
    %v1855 = vmul.f32 %v1851, %v1854
    %1856 = vst [vmem:[#allocation7] sm:$0xff] %v1855
    // Predicated region
    $region34: #{tpu_custom_call.1} parent=1 // pred_check
      _
    $region35: #{tpu_custom_call.1} parent=1 // pred_check_branch
      %1858 = sbr.rel (0) target = $region37
    $region36: #{tpu_custom_call.1} parent=1 // pred_region
      %s1860 = ssub.s32 128, 128
      %1861 = vsyncadd [#allocation4], %s1860
      %s1863 = sshll.u32 [#allocation7], 4
      %s1864 = int_to_ptr.vmem [resolvable:$true] %s1863
      %1866 = dma.vmem_to_hbm [thread:$0]  %s1864, 128, %s6, [#allocation4]
    $region37: #{tpu_custom_call.1} parent=1 // pred_fallthru
      _
    // Predicated region
    $region38: #{tpu_custom_call.1} parent=1 // pred_check
      _
    $region39: #{tpu_custom_call.1} parent=1 // pred_check_branch
      %1868 = sbr.rel (0) target = $region41
    $region40: #{tpu_custom_call.1} parent=1 // pred_region
      %1869 = dma.done [#allocation4], 128
    $region41: #{tpu_custom_call.1} parent=1 // pred_fallthru
      _
    %1870 = vsyncpa [#allocation3], 1
    %1871 = vsyncpa [#allocation6], 1
    %1872 = vsyncpa [#allocation4], 1

</llo_original>
